<compile_context>
chip_gen: v7x
topology: tpu7x:2x2x1
jax: 0.10.0
libtpu: 0.0.40
codegen_flags: <defaults>
</compile_context>

<pallas_src>
import functools

import numpy as np
import jax
import jax.numpy as jnp
from jax.experimental import pallas as pl
from jax.experimental.pallas import tpu as pltpu

# ---------------------------------------------------------------------------
# Model parameters (deterministic, from the module's default args)
# ---------------------------------------------------------------------------
N = 16          # simulation box is N x N (small for the example; default in torch is 100)
V = 0.5         # intrinsic frequency
K = 0.2         # coupling strength

# 5x5 Conv2d kernel from Kuramoto.__init__ (fixed 0/1 weights, center = 0).
_KERNEL_5x5 = (
    (0, 0, 1, 0, 0),
    (0, 1, 1, 1, 0),
    (1, 1, 0, 1, 1),
    (0, 1, 1, 1, 0),
    (0, 0, 1, 0, 0),
)
# Cross-correlation with circular 'same' padding:
#   out[i, j] = sum_{a,b} w[a,b] * x[(i + a - 2) mod N, (j + b - 2) mod N]
# -> list of (row_shift, col_shift) offsets where w == 1.
_OFFSETS = tuple(
    (a - 2, b - 2)
    for a in range(5)
    for b in range(5)
    if _KERNEL_5x5[a][b] == 1
)


def _diamond_adjacency(n):
    """Constant (n*n, n*n) 0/1 matrix A such that conv(x).flatten() == x.flatten() @ A."""
    d = n * n
    a = np.zeros((d, d), dtype=np.float32)
    for i in range(n):
        for j in range(n):
            p = i * n + j                      # output position
            for (dr, dc) in _OFFSETS:
                q = ((i + dr) % n) * n + ((j + dc) % n)   # contributing input position
                a[q, p] += 1.0
    return jnp.asarray(a)


# ---------------------------------------------------------------------------
# Pallas kernel
# ---------------------------------------------------------------------------
def kuramoto_kernel(y_ref, a_ref, out_ref, *, v, k):
    # y_ref block: (TM, D) flattened oscillator fields (lane-dense, D = 256).
    # a_ref block: (D, D) constant diamond-adjacency matrix, VMEM-resident.
    y = y_ref[...]
    a = a_ref[...]
    cosy = jnp.cos(y)
    siny = jnp.sin(y)
    conv_siny = jnp.dot(siny, a, preferred_element_type=jnp.float32,
                        precision=jax.lax.Precision.HIGHEST)
    conv_cosy = jnp.dot(cosy, a, preferred_element_type=jnp.float32,
                        precision=jax.lax.Precision.HIGHEST)
    out_ref[...] = (v + k * (cosy * conv_siny - siny * conv_cosy)).astype(out_ref.dtype)


def kuramoto_forward(y, *, n=N, v=V, k=K, tm=1024):
    """y: (M, 1, D) with D = n*n, float32.  Returns dy/dt with the same shape."""
    m = y.shape[0]
    d = n * n
    y_flat = y.reshape(m, d)                   # lane-dense layout: last dim = 256
    a = _diamond_adjacency(n).astype(y.dtype)  # (d, d)

    tm = min(tm, m)                            # block covers full M when M is small
    grid = (pl.cdiv(m, tm),)

    out = pl.pallas_call(
        functools.partial(kuramoto_kernel, v=float(v), k=float(k)),
        out_shape=jax.ShapeDtypeStruct((m, d), y.dtype),
        grid=grid,
        in_specs=[
            pl.BlockSpec((tm, d), lambda i: (i, 0)),   # batched fields
            pl.BlockSpec((d, d), lambda i: (0, 0)),    # constant A, loaded once
        ],
        out_specs=pl.BlockSpec((tm, d), lambda i: (i, 0)),
        compiler_params=pltpu.CompilerParams(
            dimension_semantics=("parallel",)),
    )(y_flat, a)
    return out.reshape(m, 1, d)


# ---------------------------------------------------------------------------
# Pure-JAX reference (roll-based stencil, independent of the matmul path)
# ---------------------------------------------------------------------------
def kuramoto_ref(y, *, n=N, v=V, k=K):
    m = y.shape[0]
    yg = y.reshape(m, n, n)
    cosy = jnp.cos(yg)
    siny = jnp.sin(yg)

    def conv(x):
        acc = jnp.zeros_like(x)
        for (dr, dc) in _OFFSETS:
            # out[i, j] = sum x[(i+dr) mod n, (j+dc) mod n]  ==  roll by (-dr, -dc)
            acc = acc + jnp.roll(jnp.roll(x, -dr, axis=-2), -dc, axis=-1)
        return acc

    out = v + k * (cosy * conv(siny) - siny * conv(cosy))
    return out.reshape(m, 1, n * n)


if __name__ == "__main__":
    key = jax.random.PRNGKey(0)
    M = 8
    D = N * N
    # Initial state analogous to init_state(): angles in [0, 2*pi), shape (M, 1, D).
    y0 = (2.0 * jnp.pi * jax.random.uniform(key, (M, 1, D))).astype(jnp.float32)

    dydt = kuramoto_forward(y0)
    dydt = jax.block_until_ready(dydt)

    ref = kuramoto_ref(y0)
    assert dydt.shape == (M, 1, D)
    # float32 (vs the module's float64 default) + f32 MXU matmul: 1e-4 tolerance.
    assert jnp.allclose(dydt, ref, atol=1e-4, rtol=1e-4), "mismatch vs reference"

    print("KERNEL_OK")
</pallas_src>

<mosaic_0001>
module attributes {stable_mosaic.version = 11 : i64} {
  func.func @kuramoto_kernel(%arg0: i32, %arg1: memref<8x256xf32, #tpu.memory_space<vmem>>, %arg2: memref<256x256xf32, #tpu.memory_space<vmem>>, %arg3: memref<8x256xf32, #tpu.memory_space<vmem>>) attributes {dimension_semantics = [#tpu.dimension_semantics<parallel>], iteration_bounds = array<i64: 1>, scalar_prefetch = 0 : i64, scratch_operands = 0 : i64, tpu.core_type = #tpu.core_type<tc>, window_params = [{transform_indices = @transform_0, window_bounds = array<i64: 8, 256>}, {pipeline_mode = #tpu.pipeline_mode<synchronous>, transform_indices = @transform_1, window_bounds = array<i64: 256, 256>}, {transform_indices = @transform_2, window_bounds = array<i64: 8, 256>}]} {
    %c0 = arith.constant 0 : index
    %c0_0 = arith.constant 0 : index
    %0 = vector.load %arg1[%c0, %c0_0] : memref<8x256xf32, #tpu.memory_space<vmem>>, vector<8x256xf32>
    %c0_1 = arith.constant 0 : index
    %c0_2 = arith.constant 0 : index
    %1 = vector.load %arg2[%c0_1, %c0_2] : memref<256x256xf32, #tpu.memory_space<vmem>>, vector<256x256xf32>
    %2 = math.cos %0 : vector<8x256xf32>
    %3 = math.sin %0 : vector<8x256xf32>
    %cst = arith.constant dense<0.000000e+00> : vector<8x256xf32>
    %4 = tpu.matmul %3, %1, %cst {dimension_numbers = #tpu.dot_dimension_numbers<[1], [0], [0], [1], [0, 0, 1, 1], [], []>, precision = #tpu.contract_precision<fp32>} : vector<8x256xf32>, vector<256x256xf32>, vector<8x256xf32> -> vector<8x256xf32>
    %cst_3 = arith.constant dense<0.000000e+00> : vector<8x256xf32>
    %5 = tpu.matmul %2, %1, %cst_3 {dimension_numbers = #tpu.dot_dimension_numbers<[1], [0], [0], [1], [0, 0, 1, 1], [], []>, precision = #tpu.contract_precision<fp32>} : vector<8x256xf32>, vector<256x256xf32>, vector<8x256xf32> -> vector<8x256xf32>
    %6 = arith.mulf %2, %4 : vector<8x256xf32>
    %7 = arith.mulf %3, %5 : vector<8x256xf32>
    %8 = arith.subf %6, %7 : vector<8x256xf32>
    %cst_4 = arith.constant 2.000000e-01 : f32
    %9 = vector.broadcast %cst_4 : f32 to vector<8x256xf32>
    %10 = arith.mulf %9, %8 : vector<8x256xf32>
    %cst_5 = arith.constant 5.000000e-01 : f32
    %11 = vector.broadcast %cst_5 : f32 to vector<8x256xf32>
    %12 = arith.addf %11, %10 : vector<8x256xf32>
    %c0_6 = arith.constant 0 : index
    %c0_7 = arith.constant 0 : index
    %13 = vector.load %arg3[%c0_6, %c0_7] : memref<8x256xf32, #tpu.memory_space<vmem>>, vector<8x256xf32>
    tpu.vector_store %arg3[%c0_6, %c0_7], %12 {strides = array<i32>} : memref<8x256xf32, #tpu.memory_space<vmem>>, vector<8x256xf32>,
    return
  }
  func.func @transform_0(%arg0: i32) -> (i32, i32) {
    %c0_i32 = arith.constant 0 : i32
    %c0_i32_0 = arith.constant 0 : i32
    return %arg0, %c0_i32 : i32, i32
  }
  func.func @transform_1(%arg0: i32) -> (i32, i32) {
    %c0_i32 = arith.constant 0 : i32
    %c0_i32_0 = arith.constant 0 : i32
    %c0_i32_1 = arith.constant 0 : i32
    return %c0_i32, %c0_i32_0 : i32, i32
  }
  func.func @transform_2(%arg0: i32) -> (i32, i32) {
    %c0_i32 = arith.constant 0 : i32
    %c0_i32_0 = arith.constant 0 : i32
    return %arg0, %c0_i32 : i32, i32
  }
}

</mosaic_0001>

<llo_original>
// kernel: tpu_custom_call.1
$region0: #{tpu_custom_call.1}
  #allocation0 [shape = 'u32[]', space=smem, size = 0x4, offset = 0x4, fixed_abs, tag = 'smem constant byte address 0x4 - core index']
  #allocation1 [shape = 'u32[144,128]{1,0:T(1,128)}', space=vmem, size = 0x12000, scoped, tag = 'internal scratch']
  %s0 = inlined_call_operand.hbm [shape: f32[8,256], index: 0, kind: input, shape index: {}]
  %s1 = inlined_call_operand.hbm [shape: f32[256,256], index: 1, kind: input, shape index: {}]
  %s2 = inlined_call_operand.hbm [shape: f32[8,256], index: 2, kind: output, shape index: {}]
  %s3 = sld [smem:[#allocation0]]
  $region26: #{tpu_custom_call.1} parent=0
    _
  %s5 = ssub.s32 1, %s3
  %s6 = scalar_select 0, %s5, %s3
  $region1: #{tpu_custom_call.1} parent=0
    #allocation2 [shape = 'u8[8192]{0}', space=vmem, size = 0x2000, scoped, tag = 'input window, operand 0, single buffered']
    #allocation3 [shape = 's32[1]{0}', space=sflag, size = 0x4, scoped, tag = 'scoped memory for tpu_custom_call.1']
    #allocation4 [shape = 's32[1]{0}', space=sflag, size = 0x4, scoped, tag = 'scoped memory for tpu_custom_call.1']
    #allocation5 [shape = 'u8[262144]{0}', space=vmem, size = 0x40000, scoped, tag = 'input window, operand 1, single buffered']
    #allocation6 [shape = 's32[1]{0}', space=sflag, size = 0x4, scoped, tag = 'scoped memory for tpu_custom_call.1']
    #allocation7 [shape = 'u8[8192]{0}', space=vmem, size = 0x2000, scoped, tag = 'output window, operand 0, single buffered']
    %7 = vsyncpa [#allocation3], 0
    %8 = vsyncpa [#allocation6], 0
    %9 = vsyncpa [#allocation4], 0
    // Predicated region
    $region2: #{tpu_custom_call.1} parent=1 // pred_check
      _
    $region3: #{tpu_custom_call.1} parent=1 // pred_check_branch
      %11 = sbr.rel (0) target = $region5
    $region4: #{tpu_custom_call.1} parent=1 // pred_region
      %s13 = ssub.s32 256, 256
      %14 = vsyncadd [#allocation3], %s13
      %s16 = sshll.u32 [#allocation2], 4
      %s17 = int_to_ptr.vmem [resolvable:$true] %s16
      %19 = dma.hbm_to_vmem [thread:$0]  %s0, 256, %s17, [#allocation3]
    $region5: #{tpu_custom_call.1} parent=1 // pred_fallthru
      _
    // Predicated region
    $region6: #{tpu_custom_call.1} parent=1 // pred_check
      _
    $region7: #{tpu_custom_call.1} parent=1 // pred_check_branch
      %21 = sbr.rel (0) target = $region9
    $region8: #{tpu_custom_call.1} parent=1 // pred_region
      %s23 = ssub.s32 8192, 8192
      %24 = vsyncadd [#allocation6], %s23
      %s25 = sshll.u32 [#allocation5], 4
      %s26 = int_to_ptr.vmem [resolvable:$true] %s25
      %31 = dma.hbm_to_vmem [thread:$0]  %s1, 8192, %s26, [#allocation6], 256, 256, 16
    $region9: #{tpu_custom_call.1} parent=1 // pred_fallthru
      _
    // Predicated region
    $region10: #{tpu_custom_call.1} parent=1 // pred_check
      _
    $region11: #{tpu_custom_call.1} parent=1 // pred_check_branch
      %33 = sbr.rel (0) target = $region13
    $region12: #{tpu_custom_call.1} parent=1 // pred_region
      %34 = dma.done [#allocation3], 256
    $region13: #{tpu_custom_call.1} parent=1 // pred_fallthru
      _
    // Predicated region
    $region14: #{tpu_custom_call.1} parent=1 // pred_check
      _
    $region15: #{tpu_custom_call.1} parent=1 // pred_check_branch
      %36 = sbr.rel (0) target = $region17
    $region16: #{tpu_custom_call.1} parent=1 // pred_region
      %37 = dma.done [#allocation6], 8192
    $region17: #{tpu_custom_call.1} parent=1 // pred_fallthru
      _
    %v38 = vld [vmem:[#allocation2] sm:$0xff]
    %v39 = vld [vmem:[#allocation2 + $0x8] sm:$0xff]
    %v40 = vld [vmem:[#allocation5] sm:$0xff]
    %v41 = vld [vmem:[#allocation5 + $0x8] sm:$0xff]
    %v42 = vld [vmem:[#allocation5 + $0x10] sm:$0xff]
    %v43 = vld [vmem:[#allocation5 + $0x18] sm:$0xff]
    %v44 = vld [vmem:[#allocation5 + $0x20] sm:$0xff]
    %v45 = vld [vmem:[#allocation5 + $0x28] sm:$0xff]
    %v46 = vld [vmem:[#allocation5 + $0x30] sm:$0xff]
    %v47 = vld [vmem:[#allocation5 + $0x38] sm:$0xff]
    %v48 = vld [vmem:[#allocation5 + $0x40] sm:$0xff]
    %v49 = vld [vmem:[#allocation5 + $0x48] sm:$0xff]
    %v50 = vld [vmem:[#allocation5 + $0x50] sm:$0xff]
    %v51 = vld [vmem:[#allocation5 + $0x58] sm:$0xff]
    %v52 = vld [vmem:[#allocation5 + $0x60] sm:$0xff]
    %v53 = vld [vmem:[#allocation5 + $0x68] sm:$0xff]
    %v54 = vld [vmem:[#allocation5 + $0x70] sm:$0xff]
    %v55 = vld [vmem:[#allocation5 + $0x78] sm:$0xff]
    %v56 = vld [vmem:[#allocation5 + $0x80] sm:$0xff]
    %v57 = vld [vmem:[#allocation5 + $0x88] sm:$0xff]
    %v58 = vld [vmem:[#allocation5 + $0x90] sm:$0xff]
    %v59 = vld [vmem:[#allocation5 + $0x98] sm:$0xff]
    %v60 = vld [vmem:[#allocation5 + $0xa0] sm:$0xff]
    %v61 = vld [vmem:[#allocation5 + $0xa8] sm:$0xff]
    %v62 = vld [vmem:[#allocation5 + $0xb0] sm:$0xff]
    %v63 = vld [vmem:[#allocation5 + $0xb8] sm:$0xff]
    %v64 = vld [vmem:[#allocation5 + $0xc0] sm:$0xff]
    %v65 = vld [vmem:[#allocation5 + $0xc8] sm:$0xff]
    %v66 = vld [vmem:[#allocation5 + $0xd0] sm:$0xff]
    %v67 = vld [vmem:[#allocation5 + $0xd8] sm:$0xff]
    %v68 = vld [vmem:[#allocation5 + $0xe0] sm:$0xff]
    %v69 = vld [vmem:[#allocation5 + $0xe8] sm:$0xff]
    %v70 = vld [vmem:[#allocation5 + $0xf0] sm:$0xff]
    %v71 = vld [vmem:[#allocation5 + $0xf8] sm:$0xff]
    %v72 = vld [vmem:[#allocation5 + $0x100] sm:$0xff]
    %v73 = vld [vmem:[#allocation5 + $0x108] sm:$0xff]
    %v74 = vld [vmem:[#allocation5 + $0x110] sm:$0xff]
    %v75 = vld [vmem:[#allocation5 + $0x118] sm:$0xff]
    %v76 = vld [vmem:[#allocation5 + $0x120] sm:$0xff]
    %v77 = vld [vmem:[#allocation5 + $0x128] sm:$0xff]
    %v78 = vld [vmem:[#allocation5 + $0x130] sm:$0xff]
    %v79 = vld [vmem:[#allocation5 + $0x138] sm:$0xff]
    %v80 = vld [vmem:[#allocation5 + $0x140] sm:$0xff]
    %v81 = vld [vmem:[#allocation5 + $0x148] sm:$0xff]
    %v82 = vld [vmem:[#allocation5 + $0x150] sm:$0xff]
    %v83 = vld [vmem:[#allocation5 + $0x158] sm:$0xff]
    %v84 = vld [vmem:[#allocation5 + $0x160] sm:$0xff]
    %v85 = vld [vmem:[#allocation5 + $0x168] sm:$0xff]
    %v86 = vld [vmem:[#allocation5 + $0x170] sm:$0xff]
    %v87 = vld [vmem:[#allocation5 + $0x178] sm:$0xff]
    %v88 = vld [vmem:[#allocation5 + $0x180] sm:$0xff]
    %v89 = vld [vmem:[#allocation5 + $0x188] sm:$0xff]
    %v90 = vld [vmem:[#allocation5 + $0x190] sm:$0xff]
    %v91 = vld [vmem:[#allocation5 + $0x198] sm:$0xff]
    %v92 = vld [vmem:[#allocation5 + $0x1a0] sm:$0xff]
    %v93 = vld [vmem:[#allocation5 + $0x1a8] sm:$0xff]
    %v94 = vld [vmem:[#allocation5 + $0x1b0] sm:$0xff]
    %v95 = vld [vmem:[#allocation5 + $0x1b8] sm:$0xff]
    %v96 = vld [vmem:[#allocation5 + $0x1c0] sm:$0xff]
    %v97 = vld [vmem:[#allocation5 + $0x1c8] sm:$0xff]
    %v98 = vld [vmem:[#allocation5 + $0x1d0] sm:$0xff]
    %v99 = vld [vmem:[#allocation5 + $0x1d8] sm:$0xff]
    %v100 = vld [vmem:[#allocation5 + $0x1e0] sm:$0xff]
    %v101 = vld [vmem:[#allocation5 + $0x1e8] sm:$0xff]
    %v102 = vld [vmem:[#allocation5 + $0x1f0] sm:$0xff]
    %v103 = vld [vmem:[#allocation5 + $0x1f8] sm:$0xff]
    %v104 = vand.u32 2147483647, %v38
    %vm105 = vcmp.le.f32.partialorder %v104, 0.7853982
    %vm106 = vcmp.lt.s32.totalorder %v38, 0
    %v107 = vand.u32 %v38, 2139095040
    %v108 = vshrl.u32 %v107, 23
    %v109 = vsub.s32 %v108, 127
    %v110 = vand.u32 2147483647, %v38
    %v111 = vand.u32 %v110, 8388607
    %v112 = vor.u32 %v111, 8388608
    %v113 = vsub.s32 0, %v112
    %v114 = vadd.s32 %v109, 1
    %vm115 = vcmp.gt.s32.totalorder %v114, 0
    %v116 = vsel %vm115, %v114, 0
    %v117 = vshrl.u32 %v116, 5
    %v118 = vand.u32 %v116, 31
    %v119 = vsub.s32 32, %v118
    %v120 = vshrl.u32 683565275, %v119
    %v121 = vshll.u32 683565275, %v118
    %v122 = vshrl.u32 2475754826, %v119
    %v123 = vor.u32 %v121, %v122
    %v124 = vshll.u32 2475754826, %v118
    %v125 = vshrl.u32 2131351028, %v119
    %v126 = vor.u32 %v124, %v125
    %v127 = vshll.u32 2131351028, %v118
    %v128 = vshrl.u32 2102212464, %v119
    %v129 = vor.u32 %v127, %v128
    %v130 = vshll.u32 2102212464, %v118
    %v131 = vshrl.u32 920167782, %v119
    %v132 = vor.u32 %v130, %v131
    %v133 = vshll.u32 920167782, %v118
    %v134 = vshrl.u32 1326507024, %v119
    %v135 = vor.u32 %v133, %v134
    %vm136 = vcmp.lt.s32.totalorder %v117, 1
    %vm137 = vcmp.lt.s32.totalorder %v117, 2
    %vm138 = vcmp.lt.s32.totalorder %v117, 3
    %vm139 = vcmp.lt.s32.totalorder %v117, 4
    %v140 = vsel %vm136, %v120, %v123
    %v141 = vsel %vm139, %v129, 2102212464
    %v142 = vsel %vm138, %v126, %v141
    %v143 = vsel %vm137, %v140, %v142
    %v144 = vsel %vm136, %v123, %v126
    %v145 = vsel %vm139, %v132, 920167782
    %v146 = vsel %vm138, %v129, %v145
    %v147 = vsel %vm137, %v144, %v146
    %v148 = vsel %vm136, %v126, %v129
    %v149 = vsel %vm139, %v135, 1326507024
    %v150 = vsel %vm138, %v132, %v149
    %v151 = vsel %vm137, %v148, %v150
    %v152 = vshll.u32 %v112, 8
    %v153 = vmul.u32.u64.compose %v152, %v151
    %v154 = vextract.low.u32 %v153
    %v155 = vextract.high.u32 %v153
    %v156 = vmul.u32.u64.compose %v152, %v147
    %v157 = vextract.low.u32 %v156
    %v158 = vextract.high.u32 %v156
    %v159 = vmul.u32 %v152, %v143
    %v160 = vadd.s32 %v155, %v157
    %vm161 = vc.u32 %v155, %v157
    %v162 = vadd.s32 %v158, 1
    %v163 = vsel %vm161, %v162, %v158
    %v164 = vadd.s32 %v159, %v163
    %v165 = vadd.s32 %v164, 536870912
    %v166 = vshrl.u32 %v165, 30
    %v167 = vshll.u32 %v166, 30
    %v168 = vsub.s32 %v164, %v167
    %vm169 = vcmp.lt.s32.totalorder %v168, 0
    %v170 = vsub.s32 0, %v168
    %v171 = vsel %vm169, %v170, %v168
    %v172 = vclz %v171
    %v173 = vsub.s32 %v172, 2
    %vm174 = vcmp.gt.s32.totalorder 0, %v173
    %v175 = vsel %vm174, 0, %v173
    %v176 = vsub.s32 32, %v175
    %v177 = vshll.u32 %v168, %v175
    %v178 = vshrl.u32 %v160, %v176
    %v179 = vor.u32 %v177, %v178
    %v180 = vsub.s32 4294967266, %v175
    %v181 = vadd.s32 %v180, 127
    %v182 = vshll.u32 %v181, 23
    %v183 = vor.u32 4788187, %v182
    %v184 = vand.u32 2147483647, %v183
    %v186 = vcvt.s32.f32 %v179
    %v187 = vmul.f32 %v186, %v184
    %v188 = vxor.u32 %v187, 2147483648
    %v189 = vsel %vm106, %v188, %v187
    %v190 = vsub.s32 4, %v166
    %v191 = vsel %vm106, %v190, %v166
    %v192 = vsel %vm105, %v38, %v189
    %v193 = vsel %vm105, 0, %v191
    %v194 = vcosq.f32.pop %v192
    %v195 = vsinq.f32.pop %v192
    %vm196 = vweird.f32 %v38
    %v197 = vand.u32 %v193, 3
    %vm198 = vcmp.lt.s32.totalorder %v197, 2
    %vm199 = vcmp.eq.s32.totalorder %v197, 0
    %v200 = vxor.u32 %v195, 2147483648
    %v201 = vsel %vm199, %v194, %v200
    %vm202 = vcmp.eq.s32.totalorder %v197, 2
    %v203 = vxor.u32 %v194, 2147483648
    %v204 = vsel %vm202, %v203, %v195
    %v205 = vsel %vm198, %v201, %v204
    %v206 = vsel %vm196, nan, %v205
    %v207 = vand.u32 2147483647, %v39
    %vm208 = vcmp.le.f32.partialorder %v207, 0.7853982
    %vm209 = vcmp.lt.s32.totalorder %v39, 0
    %v210 = vand.u32 %v39, 2139095040
    %v211 = vshrl.u32 %v210, 23
    %v212 = vsub.s32 %v211, 127
    %v213 = vand.u32 2147483647, %v39
    %v214 = vand.u32 %v213, 8388607
    %v215 = vor.u32 %v214, 8388608
    %v216 = vsub.s32 0, %v215
    %v217 = vadd.s32 %v212, 1
    %vm218 = vcmp.gt.s32.totalorder %v217, 0
    %v219 = vsel %vm218, %v217, 0
    %v220 = vshrl.u32 %v219, 5
    %v221 = vand.u32 %v219, 31
    %v222 = vsub.s32 32, %v221
    %v223 = vshrl.u32 683565275, %v222
    %v224 = vshll.u32 683565275, %v221
    %v225 = vshrl.u32 2475754826, %v222
    %v226 = vor.u32 %v224, %v225
    %v227 = vshll.u32 2475754826, %v221
    %v228 = vshrl.u32 2131351028, %v222
    %v229 = vor.u32 %v227, %v228
    %v230 = vshll.u32 2131351028, %v221
    %v231 = vshrl.u32 2102212464, %v222
    %v232 = vor.u32 %v230, %v231
    %v233 = vshll.u32 2102212464, %v221
    %v234 = vshrl.u32 920167782, %v222
    %v235 = vor.u32 %v233, %v234
    %v236 = vshll.u32 920167782, %v221
    %v237 = vshrl.u32 1326507024, %v222
    %v238 = vor.u32 %v236, %v237
    %vm239 = vcmp.lt.s32.totalorder %v220, 1
    %vm240 = vcmp.lt.s32.totalorder %v220, 2
    %vm241 = vcmp.lt.s32.totalorder %v220, 3
    %vm242 = vcmp.lt.s32.totalorder %v220, 4
    %v243 = vsel %vm239, %v223, %v226
    %v244 = vsel %vm242, %v232, 2102212464
    %v245 = vsel %vm241, %v229, %v244
    %v246 = vsel %vm240, %v243, %v245
    %v247 = vsel %vm239, %v226, %v229
    %v248 = vsel %vm242, %v235, 920167782
    %v249 = vsel %vm241, %v232, %v248
    %v250 = vsel %vm240, %v247, %v249
    %v251 = vsel %vm239, %v229, %v232
    %v252 = vsel %vm242, %v238, 1326507024
    %v253 = vsel %vm241, %v235, %v252
    %v254 = vsel %vm240, %v251, %v253
    %v255 = vshll.u32 %v215, 8
    %v256 = vmul.u32.u64.compose %v255, %v254
    %v257 = vextract.low.u32 %v256
    %v258 = vextract.high.u32 %v256
    %v259 = vmul.u32.u64.compose %v255, %v250
    %v260 = vextract.low.u32 %v259
    %v261 = vextract.high.u32 %v259
    %v262 = vmul.u32 %v255, %v246
    %v263 = vadd.s32 %v258, %v260
    %vm264 = vc.u32 %v258, %v260
    %v265 = vadd.s32 %v261, 1
    %v266 = vsel %vm264, %v265, %v261
    %v267 = vadd.s32 %v262, %v266
    %v268 = vadd.s32 %v267, 536870912
    %v269 = vshrl.u32 %v268, 30
    %v270 = vshll.u32 %v269, 30
    %v271 = vsub.s32 %v267, %v270
    %vm272 = vcmp.lt.s32.totalorder %v271, 0
    %v273 = vsub.s32 0, %v271
    %v274 = vsel %vm272, %v273, %v271
    %v275 = vclz %v274
    %v276 = vsub.s32 %v275, 2
    %vm277 = vcmp.gt.s32.totalorder 0, %v276
    %v278 = vsel %vm277, 0, %v276
    %v279 = vsub.s32 32, %v278
    %v280 = vshll.u32 %v271, %v278
    %v281 = vshrl.u32 %v263, %v279
    %v282 = vor.u32 %v280, %v281
    %v283 = vsub.s32 4294967266, %v278
    %v284 = vadd.s32 %v283, 127
    %v285 = vshll.u32 %v284, 23
    %v286 = vor.u32 4788187, %v285
    %v287 = vand.u32 2147483647, %v286
    %v289 = vcvt.s32.f32 %v282
    %v290 = vmul.f32 %v289, %v287
    %v291 = vxor.u32 %v290, 2147483648
    %v292 = vsel %vm209, %v291, %v290
    %v293 = vsub.s32 4, %v269
    %v294 = vsel %vm209, %v293, %v269
    %v295 = vsel %vm208, %v39, %v292
    %v296 = vsel %vm208, 0, %v294
    %v297 = vcosq.f32.pop %v295
    %v298 = vsinq.f32.pop %v295
    %vm299 = vweird.f32 %v39
    %v300 = vand.u32 %v296, 3
    %vm301 = vcmp.lt.s32.totalorder %v300, 2
    %vm302 = vcmp.eq.s32.totalorder %v300, 0
    %v303 = vxor.u32 %v298, 2147483648
    %v304 = vsel %vm302, %v297, %v303
    %vm305 = vcmp.eq.s32.totalorder %v300, 2
    %v306 = vxor.u32 %v297, 2147483648
    %v307 = vsel %vm305, %v306, %v298
    %v308 = vsel %vm301, %v304, %v307
    %v309 = vsel %vm299, nan, %v308
    %v310 = vand.u32 2147483647, %v38
    %vm311 = vcmp.le.f32.partialorder %v310, 0.7853982
    %vm312 = vcmp.lt.s32.totalorder %v38, 0
    %v313 = vand.u32 %v38, 2139095040
    %v314 = vshrl.u32 %v313, 23
    %v315 = vsub.s32 %v314, 127
    %v316 = vand.u32 2147483647, %v38
    %v317 = vand.u32 %v316, 8388607
    %v318 = vor.u32 %v317, 8388608
    %v319 = vsub.s32 0, %v318
    %v320 = vadd.s32 %v315, 1
    %vm321 = vcmp.gt.s32.totalorder %v320, 0
    %v322 = vsel %vm321, %v320, 0
    %v323 = vshrl.u32 %v322, 5
    %v324 = vand.u32 %v322, 31
    %v325 = vsub.s32 32, %v324
    %v326 = vshrl.u32 683565275, %v325
    %v327 = vshll.u32 683565275, %v324
    %v328 = vshrl.u32 2475754826, %v325
    %v329 = vor.u32 %v327, %v328
    %v330 = vshll.u32 2475754826, %v324
    %v331 = vshrl.u32 2131351028, %v325
    %v332 = vor.u32 %v330, %v331
    %v333 = vshll.u32 2131351028, %v324
    %v334 = vshrl.u32 2102212464, %v325
    %v335 = vor.u32 %v333, %v334
    %v336 = vshll.u32 2102212464, %v324
    %v337 = vshrl.u32 920167782, %v325
    %v338 = vor.u32 %v336, %v337
    %v339 = vshll.u32 920167782, %v324
    %v340 = vshrl.u32 1326507024, %v325
    %v341 = vor.u32 %v339, %v340
    %vm342 = vcmp.lt.s32.totalorder %v323, 1
    %vm343 = vcmp.lt.s32.totalorder %v323, 2
    %vm344 = vcmp.lt.s32.totalorder %v323, 3
    %vm345 = vcmp.lt.s32.totalorder %v323, 4
    %v346 = vsel %vm342, %v326, %v329
    %v347 = vsel %vm345, %v335, 2102212464
    %v348 = vsel %vm344, %v332, %v347
    %v349 = vsel %vm343, %v346, %v348
    %v350 = vsel %vm342, %v329, %v332
    %v351 = vsel %vm345, %v338, 920167782
    %v352 = vsel %vm344, %v335, %v351
    %v353 = vsel %vm343, %v350, %v352
    %v354 = vsel %vm342, %v332, %v335
    %v355 = vsel %vm345, %v341, 1326507024
    %v356 = vsel %vm344, %v338, %v355
    %v357 = vsel %vm343, %v354, %v356
    %v358 = vshll.u32 %v318, 8
    %v359 = vmul.u32.u64.compose %v358, %v357
    %v360 = vextract.low.u32 %v359
    %v361 = vextract.high.u32 %v359
    %v362 = vmul.u32.u64.compose %v358, %v353
    %v363 = vextract.low.u32 %v362
    %v364 = vextract.high.u32 %v362
    %v365 = vmul.u32 %v358, %v349
    %v366 = vadd.s32 %v361, %v363
    %vm367 = vc.u32 %v361, %v363
    %v368 = vadd.s32 %v364, 1
    %v369 = vsel %vm367, %v368, %v364
    %v370 = vadd.s32 %v365, %v369
    %v371 = vadd.s32 %v370, 536870912
    %v372 = vshrl.u32 %v371, 30
    %v373 = vshll.u32 %v372, 30
    %v374 = vsub.s32 %v370, %v373
    %vm375 = vcmp.lt.s32.totalorder %v374, 0
    %v376 = vsub.s32 0, %v374
    %v377 = vsel %vm375, %v376, %v374
    %v378 = vclz %v377
    %v379 = vsub.s32 %v378, 2
    %vm380 = vcmp.gt.s32.totalorder 0, %v379
    %v381 = vsel %vm380, 0, %v379
    %v382 = vsub.s32 32, %v381
    %v383 = vshll.u32 %v374, %v381
    %v384 = vshrl.u32 %v366, %v382
    %v385 = vor.u32 %v383, %v384
    %v386 = vsub.s32 4294967266, %v381
    %v387 = vadd.s32 %v386, 127
    %v388 = vshll.u32 %v387, 23
    %v389 = vor.u32 4788187, %v388
    %v390 = vand.u32 2147483647, %v389
    %v392 = vcvt.s32.f32 %v385
    %v393 = vmul.f32 %v392, %v390
    %v394 = vxor.u32 %v393, 2147483648
    %v395 = vsel %vm312, %v394, %v393
    %v396 = vsub.s32 4, %v372
    %v397 = vsel %vm312, %v396, %v372
    %v398 = vsel %vm311, %v38, %v395
    %v399 = vsel %vm311, 0, %v397
    %v400 = vcosq.f32.pop %v398
    %v401 = vsinq.f32.pop %v398
    %vm402 = vweird.f32 %v38
    %v403 = vadd.s32 %v399, 3
    %v404 = vand.u32 %v403, 3
    %vm405 = vcmp.lt.s32.totalorder %v404, 2
    %vm406 = vcmp.eq.s32.totalorder %v404, 0
    %v407 = vxor.u32 %v401, 2147483648
    %v408 = vsel %vm406, %v400, %v407
    %vm409 = vcmp.eq.s32.totalorder %v404, 2
    %v410 = vxor.u32 %v400, 2147483648
    %v411 = vsel %vm409, %v410, %v401
    %v412 = vsel %vm405, %v408, %v411
    %v413 = vsel %vm402, nan, %v412
    %v414 = vand.u32 2147483647, %v39
    %vm415 = vcmp.le.f32.partialorder %v414, 0.7853982
    %vm416 = vcmp.lt.s32.totalorder %v39, 0
    %v417 = vand.u32 %v39, 2139095040
    %v418 = vshrl.u32 %v417, 23
    %v419 = vsub.s32 %v418, 127
    %v420 = vand.u32 2147483647, %v39
    %v421 = vand.u32 %v420, 8388607
    %v422 = vor.u32 %v421, 8388608
    %v423 = vsub.s32 0, %v422
    %v424 = vadd.s32 %v419, 1
    %vm425 = vcmp.gt.s32.totalorder %v424, 0
    %v426 = vsel %vm425, %v424, 0
    %v427 = vshrl.u32 %v426, 5
    %v428 = vand.u32 %v426, 31
    %v429 = vsub.s32 32, %v428
    %v430 = vshrl.u32 683565275, %v429
    %v431 = vshll.u32 683565275, %v428
    %v432 = vshrl.u32 2475754826, %v429
    %v433 = vor.u32 %v431, %v432
    %v434 = vshll.u32 2475754826, %v428
    %v435 = vshrl.u32 2131351028, %v429
    %v436 = vor.u32 %v434, %v435
    %v437 = vshll.u32 2131351028, %v428
    %v438 = vshrl.u32 2102212464, %v429
    %v439 = vor.u32 %v437, %v438
    %v440 = vshll.u32 2102212464, %v428
    %v441 = vshrl.u32 920167782, %v429
    %v442 = vor.u32 %v440, %v441
    %v443 = vshll.u32 920167782, %v428
    %v444 = vshrl.u32 1326507024, %v429
    %v445 = vor.u32 %v443, %v444
    %vm446 = vcmp.lt.s32.totalorder %v427, 1
    %vm447 = vcmp.lt.s32.totalorder %v427, 2
    %vm448 = vcmp.lt.s32.totalorder %v427, 3
    %vm449 = vcmp.lt.s32.totalorder %v427, 4
    %v450 = vsel %vm446, %v430, %v433
    %v451 = vsel %vm449, %v439, 2102212464
    %v452 = vsel %vm448, %v436, %v451
    %v453 = vsel %vm447, %v450, %v452
    %v454 = vsel %vm446, %v433, %v436
    %v455 = vsel %vm449, %v442, 920167782
    %v456 = vsel %vm448, %v439, %v455
    %v457 = vsel %vm447, %v454, %v456
    %v458 = vsel %vm446, %v436, %v439
    %v459 = vsel %vm449, %v445, 1326507024
    %v460 = vsel %vm448, %v442, %v459
    %v461 = vsel %vm447, %v458, %v460
    %v462 = vshll.u32 %v422, 8
    %v463 = vmul.u32.u64.compose %v462, %v461
    %v464 = vextract.low.u32 %v463
    %v465 = vextract.high.u32 %v463
    %v466 = vmul.u32.u64.compose %v462, %v457
    %v467 = vextract.low.u32 %v466
    %v468 = vextract.high.u32 %v466
    %v469 = vmul.u32 %v462, %v453
    %v470 = vadd.s32 %v465, %v467
    %vm471 = vc.u32 %v465, %v467
    %v472 = vadd.s32 %v468, 1
    %v473 = vsel %vm471, %v472, %v468
    %v474 = vadd.s32 %v469, %v473
    %v475 = vadd.s32 %v474, 536870912
    %v476 = vshrl.u32 %v475, 30
    %v477 = vshll.u32 %v476, 30
    %v478 = vsub.s32 %v474, %v477
    %vm479 = vcmp.lt.s32.totalorder %v478, 0
    %v480 = vsub.s32 0, %v478
    %v481 = vsel %vm479, %v480, %v478
    %v482 = vclz %v481
    %v483 = vsub.s32 %v482, 2
    %vm484 = vcmp.gt.s32.totalorder 0, %v483
    %v485 = vsel %vm484, 0, %v483
    %v486 = vsub.s32 32, %v485
    %v487 = vshll.u32 %v478, %v485
    %v488 = vshrl.u32 %v470, %v486
    %v489 = vor.u32 %v487, %v488
    %v490 = vsub.s32 4294967266, %v485
    %v491 = vadd.s32 %v490, 127
    %v492 = vshll.u32 %v491, 23
    %v493 = vor.u32 4788187, %v492
    %v494 = vand.u32 2147483647, %v493
    %v496 = vcvt.s32.f32 %v489
    %v497 = vmul.f32 %v496, %v494
    %v498 = vxor.u32 %v497, 2147483648
    %v499 = vsel %vm416, %v498, %v497
    %v500 = vsub.s32 4, %v476
    %v501 = vsel %vm416, %v500, %v476
    %v502 = vsel %vm415, %v39, %v499
    %v503 = vsel %vm415, 0, %v501
    %v504 = vcosq.f32.pop %v502
    %v505 = vsinq.f32.pop %v502
    %vm506 = vweird.f32 %v39
    %v507 = vadd.s32 %v503, 3
    %v508 = vand.u32 %v507, 3
    %vm509 = vcmp.lt.s32.totalorder %v508, 2
    %vm510 = vcmp.eq.s32.totalorder %v508, 0
    %v511 = vxor.u32 %v505, 2147483648
    %v512 = vsel %vm510, %v504, %v511
    %vm513 = vcmp.eq.s32.totalorder %v508, 2
    %v514 = vxor.u32 %v504, 2147483648
    %v515 = vsel %vm513, %v514, %v505
    %v516 = vsel %vm509, %v512, %v515
    %v517 = vsel %vm506, nan, %v516
    %v518 = vand.u32 %v41, 4294901760
    %519 = vmatprep.subr.mxu0 %v518
    %v520 = vand.u32 %v40, 4294901760
    %521 = vmatpush1.msra.mxu0 %v520
    %v522 = vand.u32 %v43, 4294901760
    %523 = vmatprep.subr.mxu0 %v522
    %v524 = vand.u32 %v42, 4294901760
    %525 = vmatpush1.msra.mxu0 %v524
    %v526 = vand.u32 %v45, 4294901760
    %527 = vmatprep.subr.mxu0 %v526
    %v528 = vand.u32 %v44, 4294901760
    %529 = vmatpush1.msra.mxu0 %v528
    %v530 = vand.u32 %v47, 4294901760
    %531 = vmatprep.subr.mxu0 %v530
    %v532 = vand.u32 %v46, 4294901760
    %533 = vmatpush1.msra.mxu0 %v532
    %v534 = vand.u32 %v49, 4294901760
    %535 = vmatprep.subr.mxu0 %v534
    %v536 = vand.u32 %v48, 4294901760
    %537 = vmatpush1.msra.mxu0 %v536
    %v538 = vand.u32 %v51, 4294901760
    %539 = vmatprep.subr.mxu0 %v538
    %v540 = vand.u32 %v50, 4294901760
    %541 = vmatpush1.msra.mxu0 %v540
    %v542 = vand.u32 %v53, 4294901760
    %543 = vmatprep.subr.mxu0 %v542
    %v544 = vand.u32 %v52, 4294901760
    %545 = vmatpush1.msra.mxu0 %v544
    %v546 = vand.u32 %v55, 4294901760
    %547 = vmatprep.subr.mxu0 %v546
    %v548 = vand.u32 %v54, 4294901760
    %549 = vmatpush1.msra.mxu0 %v548
    %v550 = vand.u32 %v57, 4294901760
    %551 = vmatprep.subr.mxu0 %v550
    %v552 = vand.u32 %v56, 4294901760
    %553 = vmatpush1.msra.mxu0 %v552
    %v554 = vand.u32 %v59, 4294901760
    %555 = vmatprep.subr.mxu0 %v554
    %v556 = vand.u32 %v58, 4294901760
    %557 = vmatpush1.msra.mxu0 %v556
    %v558 = vand.u32 %v61, 4294901760
    %559 = vmatprep.subr.mxu0 %v558
    %v560 = vand.u32 %v60, 4294901760
    %561 = vmatpush1.msra.mxu0 %v560
    %v562 = vand.u32 %v63, 4294901760
    %563 = vmatprep.subr.mxu0 %v562
    %v564 = vand.u32 %v62, 4294901760
    %565 = vmatpush1.msra.mxu0 %v564
    %v566 = vand.u32 %v65, 4294901760
    %567 = vmatprep.subr.mxu0 %v566
    %v568 = vand.u32 %v64, 4294901760
    %569 = vmatpush1.msra.mxu0 %v568
    %v570 = vand.u32 %v67, 4294901760
    %571 = vmatprep.subr.mxu0 %v570
    %v572 = vand.u32 %v66, 4294901760
    %573 = vmatpush1.msra.mxu0 %v572
    %v574 = vand.u32 %v69, 4294901760
    %575 = vmatprep.subr.mxu0 %v574
    %v576 = vand.u32 %v68, 4294901760
    %577 = vmatpush1.msra.mxu0 %v576
    %v578 = vand.u32 %v71, 4294901760
    %579 = vmatprep.subr.mxu0 %v578
    %v580 = vand.u32 %v70, 4294901760
    %581 = vmatpush1.msra.mxu0 %v580
    %v582 = vand.u32 %v73, 4294901760
    %583 = vmatprep.subr.mxu0 %v582
    %v584 = vand.u32 %v72, 4294901760
    %585 = vmatpush1.msra.mxu0 %v584
    %v586 = vand.u32 %v75, 4294901760
    %587 = vmatprep.subr.mxu0 %v586
    %v588 = vand.u32 %v74, 4294901760
    %589 = vmatpush1.msra.mxu0 %v588
    %v590 = vand.u32 %v77, 4294901760
    %591 = vmatprep.subr.mxu0 %v590
    %v592 = vand.u32 %v76, 4294901760
    %593 = vmatpush1.msra.mxu0 %v592
    %v594 = vand.u32 %v79, 4294901760
    %595 = vmatprep.subr.mxu0 %v594
    %v596 = vand.u32 %v78, 4294901760
    %597 = vmatpush1.msra.mxu0 %v596
    %v598 = vand.u32 %v81, 4294901760
    %599 = vmatprep.subr.mxu0 %v598
    %v600 = vand.u32 %v80, 4294901760
    %601 = vmatpush1.msra.mxu0 %v600
    %v602 = vand.u32 %v83, 4294901760
    %603 = vmatprep.subr.mxu0 %v602
    %v604 = vand.u32 %v82, 4294901760
    %605 = vmatpush1.msra.mxu0 %v604
    %v606 = vand.u32 %v85, 4294901760
    %607 = vmatprep.subr.mxu0 %v606
    %v608 = vand.u32 %v84, 4294901760
    %609 = vmatpush1.msra.mxu0 %v608
    %v610 = vand.u32 %v87, 4294901760
    %611 = vmatprep.subr.mxu0 %v610
    %v612 = vand.u32 %v86, 4294901760
    %613 = vmatpush1.msra.mxu0 %v612
    %v614 = vand.u32 %v89, 4294901760
    %615 = vmatprep.subr.mxu0 %v614
    %v616 = vand.u32 %v88, 4294901760
    %617 = vmatpush1.msra.mxu0 %v616
    %v618 = vand.u32 %v91, 4294901760
    %619 = vmatprep.subr.mxu0 %v618
    %v620 = vand.u32 %v90, 4294901760
    %621 = vmatpush1.msra.mxu0 %v620
    %v622 = vand.u32 %v93, 4294901760
    %623 = vmatprep.subr.mxu0 %v622
    %v624 = vand.u32 %v92, 4294901760
    %625 = vmatpush1.msra.mxu0 %v624
    %v626 = vand.u32 %v95, 4294901760
    %627 = vmatprep.subr.mxu0 %v626
    %v628 = vand.u32 %v94, 4294901760
    %629 = vmatpush1.msra.mxu0 %v628
    %v630 = vand.u32 %v97, 4294901760
    %631 = vmatprep.subr.mxu0 %v630
    %v632 = vand.u32 %v96, 4294901760
    %633 = vmatpush1.msra.mxu0 %v632
    %v634 = vand.u32 %v99, 4294901760
    %635 = vmatprep.subr.mxu0 %v634
    %v636 = vand.u32 %v98, 4294901760
    %637 = vmatpush1.msra.mxu0 %v636
    %v638 = vand.u32 %v101, 4294901760
    %639 = vmatprep.subr.mxu0 %v638
    %v640 = vand.u32 %v100, 4294901760
    %641 = vmatpush1.msra.mxu0 %v640
    %v642 = vand.u32 %v103, 4294901760
    %643 = vmatprep.subr.mxu0 %v642
    %v644 = vand.u32 %v102, 4294901760
    %645 = vmatpush1.msra.mxu0 %v644
    %v646 = vand.u32 %v517, 4294901760
    %v647 = vsub.f32 %v517, %v646
    %v648 = vand.u32 %v647, 4294901760
    %v649 = vsub.f32 %v647, %v648
    %v650 = vand.u32 %v649, 4294901760
    %651 = vmatprep.mubr.f32.mxu0 %v650
    %v652 = vand.u32 %v413, 4294901760
    %v653 = vsub.f32 %v413, %v652
    %v654 = vand.u32 %v653, 4294901760
    %v655 = vsub.f32 %v653, %v654
    %v656 = vand.u32 %v655, 4294901760
    %657 = vmatmul.mubr.f32.gmra.mrb[0].mxu0 %v656
    %v658 = vpop.f32.mrb[0].mxu0
    %v659 = vadd.f32 0.0, %v658
    %v660 = vpop.f32.mrb[0].mxu0
    %v661 = vadd.f32 0.0, %v660
    %662 = vdwg.mxu0
    %v663 = vand.u32 %v41, 4294901760
    %v664 = vsub.f32 %v41, %v663
    %v665 = vand.u32 %v664, 4294901760
    %v666 = vsub.f32 %v664, %v665
    %v667 = vand.u32 %v666, 4294901760
    %668 = vmatprep.subr.mxu0 %v667
    %v669 = vand.u32 %v40, 4294901760
    %v670 = vsub.f32 %v40, %v669
    %v671 = vand.u32 %v670, 4294901760
    %v672 = vsub.f32 %v670, %v671
    %v673 = vand.u32 %v672, 4294901760
    %674 = vmatpush1.msra.mxu0 %v673
    %v675 = vand.u32 %v43, 4294901760
    %v676 = vsub.f32 %v43, %v675
    %v677 = vand.u32 %v676, 4294901760
    %v678 = vsub.f32 %v676, %v677
    %v679 = vand.u32 %v678, 4294901760
    %680 = vmatprep.subr.mxu0 %v679
    %v681 = vand.u32 %v42, 4294901760
    %v682 = vsub.f32 %v42, %v681
    %v683 = vand.u32 %v682, 4294901760
    %v684 = vsub.f32 %v682, %v683
    %v685 = vand.u32 %v684, 4294901760
    %686 = vmatpush1.msra.mxu0 %v685
    %v687 = vand.u32 %v45, 4294901760
    %v688 = vsub.f32 %v45, %v687
    %v689 = vand.u32 %v688, 4294901760
    %v690 = vsub.f32 %v688, %v689
    %v691 = vand.u32 %v690, 4294901760
    %692 = vmatprep.subr.mxu0 %v691
    %v693 = vand.u32 %v44, 4294901760
    %v694 = vsub.f32 %v44, %v693
    %v695 = vand.u32 %v694, 4294901760
    %v696 = vsub.f32 %v694, %v695
    %v697 = vand.u32 %v696, 4294901760
    %698 = vmatpush1.msra.mxu0 %v697
    %v699 = vand.u32 %v47, 4294901760
    %v700 = vsub.f32 %v47, %v699
    %v701 = vand.u32 %v700, 4294901760
    %v702 = vsub.f32 %v700, %v701
    %v703 = vand.u32 %v702, 4294901760
    %704 = vmatprep.subr.mxu0 %v703
    %v705 = vand.u32 %v46, 4294901760
    %v706 = vsub.f32 %v46, %v705
    %v707 = vand.u32 %v706, 4294901760
    %v708 = vsub.f32 %v706, %v707
    %v709 = vand.u32 %v708, 4294901760
    %710 = vmatpush1.msra.mxu0 %v709
    %v711 = vand.u32 %v49, 4294901760
    %v712 = vsub.f32 %v49, %v711
    %v713 = vand.u32 %v712, 4294901760
    %v714 = vsub.f32 %v712, %v713
    %v715 = vand.u32 %v714, 4294901760
    %716 = vmatprep.subr.mxu0 %v715
    %v717 = vand.u32 %v48, 4294901760
    %v718 = vsub.f32 %v48, %v717
    %v719 = vand.u32 %v718, 4294901760
    %v720 = vsub.f32 %v718, %v719
    %v721 = vand.u32 %v720, 4294901760
    %722 = vmatpush1.msra.mxu0 %v721
    %v723 = vand.u32 %v51, 4294901760
    %v724 = vsub.f32 %v51, %v723
    %v725 = vand.u32 %v724, 4294901760
    %v726 = vsub.f32 %v724, %v725
    %v727 = vand.u32 %v726, 4294901760
    %728 = vmatprep.subr.mxu0 %v727
    %v729 = vand.u32 %v50, 4294901760
    %v730 = vsub.f32 %v50, %v729
    %v731 = vand.u32 %v730, 4294901760
    %v732 = vsub.f32 %v730, %v731
    %v733 = vand.u32 %v732, 4294901760
    %734 = vmatpush1.msra.mxu0 %v733
    %v735 = vand.u32 %v53, 4294901760
    %v736 = vsub.f32 %v53, %v735
    %v737 = vand.u32 %v736, 4294901760
    %v738 = vsub.f32 %v736, %v737
    %v739 = vand.u32 %v738, 4294901760
    %740 = vmatprep.subr.mxu0 %v739
    %v741 = vand.u32 %v52, 4294901760
    %v742 = vsub.f32 %v52, %v741
    %v743 = vand.u32 %v742, 4294901760
    %v744 = vsub.f32 %v742, %v743
    %v745 = vand.u32 %v744, 4294901760
    %746 = vmatpush1.msra.mxu0 %v745
    %v747 = vand.u32 %v55, 4294901760
    %v748 = vsub.f32 %v55, %v747
    %v749 = vand.u32 %v748, 4294901760
    %v750 = vsub.f32 %v748, %v749
    %v751 = vand.u32 %v750, 4294901760
    %752 = vmatprep.subr.mxu0 %v751
    %v753 = vand.u32 %v54, 4294901760
    %v754 = vsub.f32 %v54, %v753
    %v755 = vand.u32 %v754, 4294901760
    %v756 = vsub.f32 %v754, %v755
    %v757 = vand.u32 %v756, 4294901760
    %758 = vmatpush1.msra.mxu0 %v757
    %v759 = vand.u32 %v57, 4294901760
    %v760 = vsub.f32 %v57, %v759
    %v761 = vand.u32 %v760, 4294901760
    %v762 = vsub.f32 %v760, %v761
    %v763 = vand.u32 %v762, 4294901760
    %764 = vmatprep.subr.mxu0 %v763
    %v765 = vand.u32 %v56, 4294901760
    %v766 = vsub.f32 %v56, %v765
    %v767 = vand.u32 %v766, 4294901760
    %v768 = vsub.f32 %v766, %v767
    %v769 = vand.u32 %v768, 4294901760
    %770 = vmatpush1.msra.mxu0 %v769
    %v771 = vand.u32 %v59, 4294901760
    %v772 = vsub.f32 %v59, %v771
    %v773 = vand.u32 %v772, 4294901760
    %v774 = vsub.f32 %v772, %v773
    %v775 = vand.u32 %v774, 4294901760
    %776 = vmatprep.subr.mxu0 %v775
    %v777 = vand.u32 %v58, 4294901760
    %v778 = vsub.f32 %v58, %v777
    %v779 = vand.u32 %v778, 4294901760
    %v780 = vsub.f32 %v778, %v779
    %v781 = vand.u32 %v780, 4294901760
    %782 = vmatpush1.msra.mxu0 %v781
    %v783 = vand.u32 %v61, 4294901760
    %v784 = vsub.f32 %v61, %v783
    %v785 = vand.u32 %v784, 4294901760
    %v786 = vsub.f32 %v784, %v785
    %v787 = vand.u32 %v786, 4294901760
    %788 = vmatprep.subr.mxu0 %v787
    %v789 = vand.u32 %v60, 4294901760
    %v790 = vsub.f32 %v60, %v789
    %v791 = vand.u32 %v790, 4294901760
    %v792 = vsub.f32 %v790, %v791
    %v793 = vand.u32 %v792, 4294901760
    %794 = vmatpush1.msra.mxu0 %v793
    %v795 = vand.u32 %v63, 4294901760
    %v796 = vsub.f32 %v63, %v795
    %v797 = vand.u32 %v796, 4294901760
    %v798 = vsub.f32 %v796, %v797
    %v799 = vand.u32 %v798, 4294901760
    %800 = vmatprep.subr.mxu0 %v799
    %v801 = vand.u32 %v62, 4294901760
    %v802 = vsub.f32 %v62, %v801
    %v803 = vand.u32 %v802, 4294901760
    %v804 = vsub.f32 %v802, %v803
    %v805 = vand.u32 %v804, 4294901760
    %806 = vmatpush1.msra.mxu0 %v805
    %v807 = vand.u32 %v65, 4294901760
    %v808 = vsub.f32 %v65, %v807
    %v809 = vand.u32 %v808, 4294901760
    %v810 = vsub.f32 %v808, %v809
    %v811 = vand.u32 %v810, 4294901760
    %812 = vmatprep.subr.mxu0 %v811
    %v813 = vand.u32 %v64, 4294901760
    %v814 = vsub.f32 %v64, %v813
    %v815 = vand.u32 %v814, 4294901760
    %v816 = vsub.f32 %v814, %v815
    %v817 = vand.u32 %v816, 4294901760
    %818 = vmatpush1.msra.mxu0 %v817
    %v819 = vand.u32 %v67, 4294901760
    %v820 = vsub.f32 %v67, %v819
    %v821 = vand.u32 %v820, 4294901760
    %v822 = vsub.f32 %v820, %v821
    %v823 = vand.u32 %v822, 4294901760
    %824 = vmatprep.subr.mxu0 %v823
    %v825 = vand.u32 %v66, 4294901760
    %v826 = vsub.f32 %v66, %v825
    %v827 = vand.u32 %v826, 4294901760
    %v828 = vsub.f32 %v826, %v827
    %v829 = vand.u32 %v828, 4294901760
    %830 = vmatpush1.msra.mxu0 %v829
    %v831 = vand.u32 %v69, 4294901760
    %v832 = vsub.f32 %v69, %v831
    %v833 = vand.u32 %v832, 4294901760
    %v834 = vsub.f32 %v832, %v833
    %v835 = vand.u32 %v834, 4294901760
    %836 = vmatprep.subr.mxu0 %v835
    %v837 = vand.u32 %v68, 4294901760
    %v838 = vsub.f32 %v68, %v837
    %v839 = vand.u32 %v838, 4294901760
    %v840 = vsub.f32 %v838, %v839
    %v841 = vand.u32 %v840, 4294901760
    %842 = vmatpush1.msra.mxu0 %v841
    %v843 = vand.u32 %v71, 4294901760
    %v844 = vsub.f32 %v71, %v843
    %v845 = vand.u32 %v844, 4294901760
    %v846 = vsub.f32 %v844, %v845
    %v847 = vand.u32 %v846, 4294901760
    %848 = vmatprep.subr.mxu0 %v847
    %v849 = vand.u32 %v70, 4294901760
    %v850 = vsub.f32 %v70, %v849
    %v851 = vand.u32 %v850, 4294901760
    %v852 = vsub.f32 %v850, %v851
    %v853 = vand.u32 %v852, 4294901760
    %854 = vmatpush1.msra.mxu0 %v853
    %v855 = vand.u32 %v73, 4294901760
    %v856 = vsub.f32 %v73, %v855
    %v857 = vand.u32 %v856, 4294901760
    %v858 = vsub.f32 %v856, %v857
    %v859 = vand.u32 %v858, 4294901760
    %860 = vmatprep.subr.mxu0 %v859
    %v861 = vand.u32 %v72, 4294901760
    %v862 = vsub.f32 %v72, %v861
    %v863 = vand.u32 %v862, 4294901760
    %v864 = vsub.f32 %v862, %v863
    %v865 = vand.u32 %v864, 4294901760
    %866 = vmatpush1.msra.mxu0 %v865
    %v867 = vand.u32 %v75, 4294901760
    %v868 = vsub.f32 %v75, %v867
    %v869 = vand.u32 %v868, 4294901760
    %v870 = vsub.f32 %v868, %v869
    %v871 = vand.u32 %v870, 4294901760
    %872 = vmatprep.subr.mxu0 %v871
    %v873 = vand.u32 %v74, 4294901760
    %v874 = vsub.f32 %v74, %v873
    %v875 = vand.u32 %v874, 4294901760
    %v876 = vsub.f32 %v874, %v875
    %v877 = vand.u32 %v876, 4294901760
    %878 = vmatpush1.msra.mxu0 %v877
    %v879 = vand.u32 %v77, 4294901760
    %v880 = vsub.f32 %v77, %v879
    %v881 = vand.u32 %v880, 4294901760
    %v882 = vsub.f32 %v880, %v881
    %v883 = vand.u32 %v882, 4294901760
    %884 = vmatprep.subr.mxu0 %v883
    %v885 = vand.u32 %v76, 4294901760
    %v886 = vsub.f32 %v76, %v885
    %v887 = vand.u32 %v886, 4294901760
    %v888 = vsub.f32 %v886, %v887
    %v889 = vand.u32 %v888, 4294901760
    %890 = vmatpush1.msra.mxu0 %v889
    %v891 = vand.u32 %v79, 4294901760
    %v892 = vsub.f32 %v79, %v891
    %v893 = vand.u32 %v892, 4294901760
    %v894 = vsub.f32 %v892, %v893
    %v895 = vand.u32 %v894, 4294901760
    %896 = vmatprep.subr.mxu0 %v895
    %v897 = vand.u32 %v78, 4294901760
    %v898 = vsub.f32 %v78, %v897
    %v899 = vand.u32 %v898, 4294901760
    %v900 = vsub.f32 %v898, %v899
    %v901 = vand.u32 %v900, 4294901760
    %902 = vmatpush1.msra.mxu0 %v901
    %v903 = vand.u32 %v81, 4294901760
    %v904 = vsub.f32 %v81, %v903
    %v905 = vand.u32 %v904, 4294901760
    %v906 = vsub.f32 %v904, %v905
    %v907 = vand.u32 %v906, 4294901760
    %908 = vmatprep.subr.mxu0 %v907
    %v909 = vand.u32 %v80, 4294901760
    %v910 = vsub.f32 %v80, %v909
    %v911 = vand.u32 %v910, 4294901760
    %v912 = vsub.f32 %v910, %v911
    %v913 = vand.u32 %v912, 4294901760
    %914 = vmatpush1.msra.mxu0 %v913
    %v915 = vand.u32 %v83, 4294901760
    %v916 = vsub.f32 %v83, %v915
    %v917 = vand.u32 %v916, 4294901760
    %v918 = vsub.f32 %v916, %v917
    %v919 = vand.u32 %v918, 4294901760
    %920 = vmatprep.subr.mxu0 %v919
    %v921 = vand.u32 %v82, 4294901760
    %v922 = vsub.f32 %v82, %v921
    %v923 = vand.u32 %v922, 4294901760
    %v924 = vsub.f32 %v922, %v923
    %v925 = vand.u32 %v924, 4294901760
    %926 = vmatpush1.msra.mxu0 %v925
    %v927 = vand.u32 %v85, 4294901760
    %v928 = vsub.f32 %v85, %v927
    %v929 = vand.u32 %v928, 4294901760
    %v930 = vsub.f32 %v928, %v929
    %v931 = vand.u32 %v930, 4294901760
    %932 = vmatprep.subr.mxu0 %v931
    %v933 = vand.u32 %v84, 4294901760
    %v934 = vsub.f32 %v84, %v933
    %v935 = vand.u32 %v934, 4294901760
    %v936 = vsub.f32 %v934, %v935
    %v937 = vand.u32 %v936, 4294901760
    %938 = vmatpush1.msra.mxu0 %v937
    %v939 = vand.u32 %v87, 4294901760
    %v940 = vsub.f32 %v87, %v939
    %v941 = vand.u32 %v940, 4294901760
    %v942 = vsub.f32 %v940, %v941
    %v943 = vand.u32 %v942, 4294901760
    %944 = vmatprep.subr.mxu0 %v943
    %v945 = vand.u32 %v86, 4294901760
    %v946 = vsub.f32 %v86, %v945
    %v947 = vand.u32 %v946, 4294901760
    %v948 = vsub.f32 %v946, %v947
    %v949 = vand.u32 %v948, 4294901760
    %950 = vmatpush1.msra.mxu0 %v949
    %v951 = vand.u32 %v89, 4294901760
    %v952 = vsub.f32 %v89, %v951
    %v953 = vand.u32 %v952, 4294901760
    %v954 = vsub.f32 %v952, %v953
    %v955 = vand.u32 %v954, 4294901760
    %956 = vmatprep.subr.mxu0 %v955
    %v957 = vand.u32 %v88, 4294901760
    %v958 = vsub.f32 %v88, %v957
    %v959 = vand.u32 %v958, 4294901760
    %v960 = vsub.f32 %v958, %v959
    %v961 = vand.u32 %v960, 4294901760
    %962 = vmatpush1.msra.mxu0 %v961
    %v963 = vand.u32 %v91, 4294901760
    %v964 = vsub.f32 %v91, %v963
    %v965 = vand.u32 %v964, 4294901760
    %v966 = vsub.f32 %v964, %v965
    %v967 = vand.u32 %v966, 4294901760
    %968 = vmatprep.subr.mxu0 %v967
    %v969 = vand.u32 %v90, 4294901760
    %v970 = vsub.f32 %v90, %v969
    %v971 = vand.u32 %v970, 4294901760
    %v972 = vsub.f32 %v970, %v971
    %v973 = vand.u32 %v972, 4294901760
    %974 = vmatpush1.msra.mxu0 %v973
    %v975 = vand.u32 %v93, 4294901760
    %v976 = vsub.f32 %v93, %v975
    %v977 = vand.u32 %v976, 4294901760
    %v978 = vsub.f32 %v976, %v977
    %v979 = vand.u32 %v978, 4294901760
    %980 = vmatprep.subr.mxu0 %v979
    %v981 = vand.u32 %v92, 4294901760
    %v982 = vsub.f32 %v92, %v981
    %v983 = vand.u32 %v982, 4294901760
    %v984 = vsub.f32 %v982, %v983
    %v985 = vand.u32 %v984, 4294901760
    %986 = vmatpush1.msra.mxu0 %v985
    %v987 = vand.u32 %v95, 4294901760
    %v988 = vsub.f32 %v95, %v987
    %v989 = vand.u32 %v988, 4294901760
    %v990 = vsub.f32 %v988, %v989
    %v991 = vand.u32 %v990, 4294901760
    %992 = vmatprep.subr.mxu0 %v991
    %v993 = vand.u32 %v94, 4294901760
    %v994 = vsub.f32 %v94, %v993
    %v995 = vand.u32 %v994, 4294901760
    %v996 = vsub.f32 %v994, %v995
    %v997 = vand.u32 %v996, 4294901760
    %998 = vmatpush1.msra.mxu0 %v997
    %v999 = vand.u32 %v97, 4294901760
    %v1000 = vsub.f32 %v97, %v999
    %v1001 = vand.u32 %v1000, 4294901760
    %v1002 = vsub.f32 %v1000, %v1001
    %v1003 = vand.u32 %v1002, 4294901760
    %1004 = vmatprep.subr.mxu0 %v1003
    %v1005 = vand.u32 %v96, 4294901760
    %v1006 = vsub.f32 %v96, %v1005
    %v1007 = vand.u32 %v1006, 4294901760
    %v1008 = vsub.f32 %v1006, %v1007
    %v1009 = vand.u32 %v1008, 4294901760
    %1010 = vmatpush1.msra.mxu0 %v1009
    %v1011 = vand.u32 %v99, 4294901760
    %v1012 = vsub.f32 %v99, %v1011
    %v1013 = vand.u32 %v1012, 4294901760
    %v1014 = vsub.f32 %v1012, %v1013
    %v1015 = vand.u32 %v1014, 4294901760
    %1016 = vmatprep.subr.mxu0 %v1015
    %v1017 = vand.u32 %v98, 4294901760
    %v1018 = vsub.f32 %v98, %v1017
    %v1019 = vand.u32 %v1018, 4294901760
    %v1020 = vsub.f32 %v1018, %v1019
    %v1021 = vand.u32 %v1020, 4294901760
    %1022 = vmatpush1.msra.mxu0 %v1021
    %v1023 = vand.u32 %v101, 4294901760
    %v1024 = vsub.f32 %v101, %v1023
    %v1025 = vand.u32 %v1024, 4294901760
    %v1026 = vsub.f32 %v1024, %v1025
    %v1027 = vand.u32 %v1026, 4294901760
    %1028 = vmatprep.subr.mxu0 %v1027
    %v1029 = vand.u32 %v100, 4294901760
    %v1030 = vsub.f32 %v100, %v1029
    %v1031 = vand.u32 %v1030, 4294901760
    %v1032 = vsub.f32 %v1030, %v1031
    %v1033 = vand.u32 %v1032, 4294901760
    %1034 = vmatpush1.msra.mxu0 %v1033
    %v1035 = vand.u32 %v103, 4294901760
    %v1036 = vsub.f32 %v103, %v1035
    %v1037 = vand.u32 %v1036, 4294901760
    %v1038 = vsub.f32 %v1036, %v1037
    %v1039 = vand.u32 %v1038, 4294901760
    %1040 = vmatprep.subr.mxu0 %v1039
    %v1041 = vand.u32 %v102, 4294901760
    %v1042 = vsub.f32 %v102, %v1041
    %v1043 = vand.u32 %v1042, 4294901760
    %v1044 = vsub.f32 %v1042, %v1043
    %v1045 = vand.u32 %v1044, 4294901760
    %1046 = vmatpush1.msra.mxu0 %v1045
    %v1047 = vand.u32 %v517, 4294901760
    %1048 = vmatprep.mubr.f32.mxu0 %v1047
    %v1049 = vand.u32 %v413, 4294901760
    %1050 = vmatmul.mubr.f32.gmra.mrb[0].mxu0 %v1049
    %v1051 = vpop.f32.mrb[0].mxu0
    %v1052 = vadd.f32 %v659, %v1051
    %v1053 = vpop.f32.mrb[0].mxu0
    %v1054 = vadd.f32 %v661, %v1053
    %1055 = vdwg.mxu0
    %v1056 = vand.u32 %v41, 4294901760
    %v1057 = vsub.f32 %v41, %v1056
    %1058 = vmatprep.subr.mxu0 %v1057
    %v1059 = vand.u32 %v40, 4294901760
    %v1060 = vsub.f32 %v40, %v1059
    %1061 = vmatpush1.msra.mxu0 %v1060
    %v1062 = vand.u32 %v43, 4294901760
    %v1063 = vsub.f32 %v43, %v1062
    %1064 = vmatprep.subr.mxu0 %v1063
    %v1065 = vand.u32 %v42, 4294901760
    %v1066 = vsub.f32 %v42, %v1065
    %1067 = vmatpush1.msra.mxu0 %v1066
    %v1068 = vand.u32 %v45, 4294901760
    %v1069 = vsub.f32 %v45, %v1068
    %1070 = vmatprep.subr.mxu0 %v1069
    %v1071 = vand.u32 %v44, 4294901760
    %v1072 = vsub.f32 %v44, %v1071
    %1073 = vmatpush1.msra.mxu0 %v1072
    %v1074 = vand.u32 %v47, 4294901760
    %v1075 = vsub.f32 %v47, %v1074
    %1076 = vmatprep.subr.mxu0 %v1075
    %v1077 = vand.u32 %v46, 4294901760
    %v1078 = vsub.f32 %v46, %v1077
    %1079 = vmatpush1.msra.mxu0 %v1078
    %v1080 = vand.u32 %v49, 4294901760
    %v1081 = vsub.f32 %v49, %v1080
    %1082 = vmatprep.subr.mxu0 %v1081
    %v1083 = vand.u32 %v48, 4294901760
    %v1084 = vsub.f32 %v48, %v1083
    %1085 = vmatpush1.msra.mxu0 %v1084
    %v1086 = vand.u32 %v51, 4294901760
    %v1087 = vsub.f32 %v51, %v1086
    %1088 = vmatprep.subr.mxu0 %v1087
    %v1089 = vand.u32 %v50, 4294901760
    %v1090 = vsub.f32 %v50, %v1089
    %1091 = vmatpush1.msra.mxu0 %v1090
    %v1092 = vand.u32 %v53, 4294901760
    %v1093 = vsub.f32 %v53, %v1092
    %1094 = vmatprep.subr.mxu0 %v1093
    %v1095 = vand.u32 %v52, 4294901760
    %v1096 = vsub.f32 %v52, %v1095
    %1097 = vmatpush1.msra.mxu0 %v1096
    %v1098 = vand.u32 %v55, 4294901760
    %v1099 = vsub.f32 %v55, %v1098
    %1100 = vmatprep.subr.mxu0 %v1099
    %v1101 = vand.u32 %v54, 4294901760
    %v1102 = vsub.f32 %v54, %v1101
    %1103 = vmatpush1.msra.mxu0 %v1102
    %v1104 = vand.u32 %v57, 4294901760
    %v1105 = vsub.f32 %v57, %v1104
    %1106 = vmatprep.subr.mxu0 %v1105
    %v1107 = vand.u32 %v56, 4294901760
    %v1108 = vsub.f32 %v56, %v1107
    %1109 = vmatpush1.msra.mxu0 %v1108
    %v1110 = vand.u32 %v59, 4294901760
    %v1111 = vsub.f32 %v59, %v1110
    %1112 = vmatprep.subr.mxu0 %v1111
    %v1113 = vand.u32 %v58, 4294901760
    %v1114 = vsub.f32 %v58, %v1113
    %1115 = vmatpush1.msra.mxu0 %v1114
    %v1116 = vand.u32 %v61, 4294901760
    %v1117 = vsub.f32 %v61, %v1116
    %1118 = vmatprep.subr.mxu0 %v1117
    %v1119 = vand.u32 %v60, 4294901760
    %v1120 = vsub.f32 %v60, %v1119
    %1121 = vmatpush1.msra.mxu0 %v1120
    %v1122 = vand.u32 %v63, 4294901760
    %v1123 = vsub.f32 %v63, %v1122
    %1124 = vmatprep.subr.mxu0 %v1123
    %v1125 = vand.u32 %v62, 4294901760
    %v1126 = vsub.f32 %v62, %v1125
    %1127 = vmatpush1.msra.mxu0 %v1126
    %v1128 = vand.u32 %v65, 4294901760
    %v1129 = vsub.f32 %v65, %v1128
    %1130 = vmatprep.subr.mxu0 %v1129
    %v1131 = vand.u32 %v64, 4294901760
    %v1132 = vsub.f32 %v64, %v1131
    %1133 = vmatpush1.msra.mxu0 %v1132
    %v1134 = vand.u32 %v67, 4294901760
    %v1135 = vsub.f32 %v67, %v1134
    %1136 = vmatprep.subr.mxu0 %v1135
    %v1137 = vand.u32 %v66, 4294901760
    %v1138 = vsub.f32 %v66, %v1137
    %1139 = vmatpush1.msra.mxu0 %v1138
    %v1140 = vand.u32 %v69, 4294901760
    %v1141 = vsub.f32 %v69, %v1140
    %1142 = vmatprep.subr.mxu0 %v1141
    %v1143 = vand.u32 %v68, 4294901760
    %v1144 = vsub.f32 %v68, %v1143
    %1145 = vmatpush1.msra.mxu0 %v1144
    %v1146 = vand.u32 %v71, 4294901760
    %v1147 = vsub.f32 %v71, %v1146
    %1148 = vmatprep.subr.mxu0 %v1147
    %v1149 = vand.u32 %v70, 4294901760
    %v1150 = vsub.f32 %v70, %v1149
    %1151 = vmatpush1.msra.mxu0 %v1150
    %v1152 = vand.u32 %v73, 4294901760
    %v1153 = vsub.f32 %v73, %v1152
    %1154 = vmatprep.subr.mxu0 %v1153
    %v1155 = vand.u32 %v72, 4294901760
    %v1156 = vsub.f32 %v72, %v1155
    %1157 = vmatpush1.msra.mxu0 %v1156
    %v1158 = vand.u32 %v75, 4294901760
    %v1159 = vsub.f32 %v75, %v1158
    %1160 = vmatprep.subr.mxu0 %v1159
    %v1161 = vand.u32 %v74, 4294901760
    %v1162 = vsub.f32 %v74, %v1161
    %1163 = vmatpush1.msra.mxu0 %v1162
    %v1164 = vand.u32 %v77, 4294901760
    %v1165 = vsub.f32 %v77, %v1164
    %1166 = vmatprep.subr.mxu0 %v1165
    %v1167 = vand.u32 %v76, 4294901760
    %v1168 = vsub.f32 %v76, %v1167
    %1169 = vmatpush1.msra.mxu0 %v1168
    %v1170 = vand.u32 %v79, 4294901760
    %v1171 = vsub.f32 %v79, %v1170
    %1172 = vmatprep.subr.mxu0 %v1171
    %v1173 = vand.u32 %v78, 4294901760
    %v1174 = vsub.f32 %v78, %v1173
    %1175 = vmatpush1.msra.mxu0 %v1174
    %v1176 = vand.u32 %v81, 4294901760
    %v1177 = vsub.f32 %v81, %v1176
    %1178 = vmatprep.subr.mxu0 %v1177
    %v1179 = vand.u32 %v80, 4294901760
    %v1180 = vsub.f32 %v80, %v1179
    %1181 = vmatpush1.msra.mxu0 %v1180
    %v1182 = vand.u32 %v83, 4294901760
    %v1183 = vsub.f32 %v83, %v1182
    %1184 = vmatprep.subr.mxu0 %v1183
    %v1185 = vand.u32 %v82, 4294901760
    %v1186 = vsub.f32 %v82, %v1185
    %1187 = vmatpush1.msra.mxu0 %v1186
    %v1188 = vand.u32 %v85, 4294901760
    %v1189 = vsub.f32 %v85, %v1188
    %1190 = vmatprep.subr.mxu0 %v1189
    %v1191 = vand.u32 %v84, 4294901760
    %v1192 = vsub.f32 %v84, %v1191
    %1193 = vmatpush1.msra.mxu0 %v1192
    %v1194 = vand.u32 %v87, 4294901760
    %v1195 = vsub.f32 %v87, %v1194
    %1196 = vmatprep.subr.mxu0 %v1195
    %v1197 = vand.u32 %v86, 4294901760
    %v1198 = vsub.f32 %v86, %v1197
    %1199 = vmatpush1.msra.mxu0 %v1198
    %v1200 = vand.u32 %v89, 4294901760
    %v1201 = vsub.f32 %v89, %v1200
    %1202 = vmatprep.subr.mxu0 %v1201
    %v1203 = vand.u32 %v88, 4294901760
    %v1204 = vsub.f32 %v88, %v1203
    %1205 = vmatpush1.msra.mxu0 %v1204
    %v1206 = vand.u32 %v91, 4294901760
    %v1207 = vsub.f32 %v91, %v1206
    %1208 = vmatprep.subr.mxu0 %v1207
    %v1209 = vand.u32 %v90, 4294901760
    %v1210 = vsub.f32 %v90, %v1209
    %1211 = vmatpush1.msra.mxu0 %v1210
    %v1212 = vand.u32 %v93, 4294901760
    %v1213 = vsub.f32 %v93, %v1212
    %1214 = vmatprep.subr.mxu0 %v1213
    %v1215 = vand.u32 %v92, 4294901760
    %v1216 = vsub.f32 %v92, %v1215
    %1217 = vmatpush1.msra.mxu0 %v1216
    %v1218 = vand.u32 %v95, 4294901760
    %v1219 = vsub.f32 %v95, %v1218
    %1220 = vmatprep.subr.mxu0 %v1219
    %v1221 = vand.u32 %v94, 4294901760
    %v1222 = vsub.f32 %v94, %v1221
    %1223 = vmatpush1.msra.mxu0 %v1222
    %v1224 = vand.u32 %v97, 4294901760
    %v1225 = vsub.f32 %v97, %v1224
    %1226 = vmatprep.subr.mxu0 %v1225
    %v1227 = vand.u32 %v96, 4294901760
    %v1228 = vsub.f32 %v96, %v1227
    %1229 = vmatpush1.msra.mxu0 %v1228
    %v1230 = vand.u32 %v99, 4294901760
    %v1231 = vsub.f32 %v99, %v1230
    %1232 = vmatprep.subr.mxu0 %v1231
    %v1233 = vand.u32 %v98, 4294901760
    %v1234 = vsub.f32 %v98, %v1233
    %1235 = vmatpush1.msra.mxu0 %v1234
    %v1236 = vand.u32 %v101, 4294901760
    %v1237 = vsub.f32 %v101, %v1236
    %1238 = vmatprep.subr.mxu0 %v1237
    %v1239 = vand.u32 %v100, 4294901760
    %v1240 = vsub.f32 %v100, %v1239
    %1241 = vmatpush1.msra.mxu0 %v1240
    %v1242 = vand.u32 %v103, 4294901760
    %v1243 = vsub.f32 %v103, %v1242
    %1244 = vmatprep.subr.mxu0 %v1243
    %v1245 = vand.u32 %v102, 4294901760
    %v1246 = vsub.f32 %v102, %v1245
    %1247 = vmatpush1.msra.mxu0 %v1246
    %v1248 = vand.u32 %v517, 4294901760
    %v1249 = vsub.f32 %v517, %v1248
    %1250 = vmatprep.mubr.f32.mxu0 %v1249
    %v1251 = vand.u32 %v413, 4294901760
    %v1252 = vsub.f32 %v413, %v1251
    %1253 = vmatmul.mubr.f32.gmra.mrb[0].mxu0 %v1252
    %v1254 = vpop.f32.mrb[0].mxu0
    %v1255 = vadd.f32 %v1052, %v1254
    %v1256 = vpop.f32.mrb[0].mxu0
    %v1257 = vadd.f32 %v1054, %v1256
    %1258 = vdwg.mxu0
    %v1259 = vand.u32 %v41, 4294901760
    %1260 = vmatprep.subr.mxu0 %v1259
    %v1261 = vand.u32 %v40, 4294901760
    %1262 = vmatpush1.msra.mxu0 %v1261
    %v1263 = vand.u32 %v43, 4294901760
    %1264 = vmatprep.subr.mxu0 %v1263
    %v1265 = vand.u32 %v42, 4294901760
    %1266 = vmatpush1.msra.mxu0 %v1265
    %v1267 = vand.u32 %v45, 4294901760
    %1268 = vmatprep.subr.mxu0 %v1267
    %v1269 = vand.u32 %v44, 4294901760
    %1270 = vmatpush1.msra.mxu0 %v1269
    %v1271 = vand.u32 %v47, 4294901760
    %1272 = vmatprep.subr.mxu0 %v1271
    %v1273 = vand.u32 %v46, 4294901760
    %1274 = vmatpush1.msra.mxu0 %v1273
    %v1275 = vand.u32 %v49, 4294901760
    %1276 = vmatprep.subr.mxu0 %v1275
    %v1277 = vand.u32 %v48, 4294901760
    %1278 = vmatpush1.msra.mxu0 %v1277
    %v1279 = vand.u32 %v51, 4294901760
    %1280 = vmatprep.subr.mxu0 %v1279
    %v1281 = vand.u32 %v50, 4294901760
    %1282 = vmatpush1.msra.mxu0 %v1281
    %v1283 = vand.u32 %v53, 4294901760
    %1284 = vmatprep.subr.mxu0 %v1283
    %v1285 = vand.u32 %v52, 4294901760
    %1286 = vmatpush1.msra.mxu0 %v1285
    %v1287 = vand.u32 %v55, 4294901760
    %1288 = vmatprep.subr.mxu0 %v1287
    %v1289 = vand.u32 %v54, 4294901760
    %1290 = vmatpush1.msra.mxu0 %v1289
    %v1291 = vand.u32 %v57, 4294901760
    %1292 = vmatprep.subr.mxu0 %v1291
    %v1293 = vand.u32 %v56, 4294901760
    %1294 = vmatpush1.msra.mxu0 %v1293
    %v1295 = vand.u32 %v59, 4294901760
    %1296 = vmatprep.subr.mxu0 %v1295
    %v1297 = vand.u32 %v58, 4294901760
    %1298 = vmatpush1.msra.mxu0 %v1297
    %v1299 = vand.u32 %v61, 4294901760
    %1300 = vmatprep.subr.mxu0 %v1299
    %v1301 = vand.u32 %v60, 4294901760
    %1302 = vmatpush1.msra.mxu0 %v1301
    %v1303 = vand.u32 %v63, 4294901760
    %1304 = vmatprep.subr.mxu0 %v1303
    %v1305 = vand.u32 %v62, 4294901760
    %1306 = vmatpush1.msra.mxu0 %v1305
    %v1307 = vand.u32 %v65, 4294901760
    %1308 = vmatprep.subr.mxu0 %v1307
    %v1309 = vand.u32 %v64, 4294901760
    %1310 = vmatpush1.msra.mxu0 %v1309
    %v1311 = vand.u32 %v67, 4294901760
    %1312 = vmatprep.subr.mxu0 %v1311
    %v1313 = vand.u32 %v66, 4294901760
    %1314 = vmatpush1.msra.mxu0 %v1313
    %v1315 = vand.u32 %v69, 4294901760
    %1316 = vmatprep.subr.mxu0 %v1315
    %v1317 = vand.u32 %v68, 4294901760
    %1318 = vmatpush1.msra.mxu0 %v1317
    %v1319 = vand.u32 %v71, 4294901760
    %1320 = vmatprep.subr.mxu0 %v1319
    %v1321 = vand.u32 %v70, 4294901760
    %1322 = vmatpush1.msra.mxu0 %v1321
    %v1323 = vand.u32 %v73, 4294901760
    %1324 = vmatprep.subr.mxu0 %v1323
    %v1325 = vand.u32 %v72, 4294901760
    %1326 = vmatpush1.msra.mxu0 %v1325
    %v1327 = vand.u32 %v75, 4294901760
    %1328 = vmatprep.subr.mxu0 %v1327
    %v1329 = vand.u32 %v74, 4294901760
    %1330 = vmatpush1.msra.mxu0 %v1329
    %v1331 = vand.u32 %v77, 4294901760
    %1332 = vmatprep.subr.mxu0 %v1331
    %v1333 = vand.u32 %v76, 4294901760
    %1334 = vmatpush1.msra.mxu0 %v1333
    %v1335 = vand.u32 %v79, 4294901760
    %1336 = vmatprep.subr.mxu0 %v1335
    %v1337 = vand.u32 %v78, 4294901760
    %1338 = vmatpush1.msra.mxu0 %v1337
    %v1339 = vand.u32 %v81, 4294901760
    %1340 = vmatprep.subr.mxu0 %v1339
    %v1341 = vand.u32 %v80, 4294901760
    %1342 = vmatpush1.msra.mxu0 %v1341
    %v1343 = vand.u32 %v83, 4294901760
    %1344 = vmatprep.subr.mxu0 %v1343
    %v1345 = vand.u32 %v82, 4294901760
    %1346 = vmatpush1.msra.mxu0 %v1345
    %v1347 = vand.u32 %v85, 4294901760
    %1348 = vmatprep.subr.mxu0 %v1347
    %v1349 = vand.u32 %v84, 4294901760
    %1350 = vmatpush1.msra.mxu0 %v1349
    %v1351 = vand.u32 %v87, 4294901760
    %1352 = vmatprep.subr.mxu0 %v1351
    %v1353 = vand.u32 %v86, 4294901760
    %1354 = vmatpush1.msra.mxu0 %v1353
    %v1355 = vand.u32 %v89, 4294901760
    %1356 = vmatprep.subr.mxu0 %v1355
    %v1357 = vand.u32 %v88, 4294901760
    %1358 = vmatpush1.msra.mxu0 %v1357
    %v1359 = vand.u32 %v91, 4294901760
    %1360 = vmatprep.subr.mxu0 %v1359
    %v1361 = vand.u32 %v90, 4294901760
    %1362 = vmatpush1.msra.mxu0 %v1361
    %v1363 = vand.u32 %v93, 4294901760
    %1364 = vmatprep.subr.mxu0 %v1363
    %v1365 = vand.u32 %v92, 4294901760
    %1366 = vmatpush1.msra.mxu0 %v1365
    %v1367 = vand.u32 %v95, 4294901760
    %1368 = vmatprep.subr.mxu0 %v1367
    %v1369 = vand.u32 %v94, 4294901760
    %1370 = vmatpush1.msra.mxu0 %v1369
    %v1371 = vand.u32 %v97, 4294901760
    %1372 = vmatprep.subr.mxu0 %v1371
    %v1373 = vand.u32 %v96, 4294901760
    %1374 = vmatpush1.msra.mxu0 %v1373
    %v1375 = vand.u32 %v99, 4294901760
    %1376 = vmatprep.subr.mxu0 %v1375
    %v1377 = vand.u32 %v98, 4294901760
    %1378 = vmatpush1.msra.mxu0 %v1377
    %v1379 = vand.u32 %v101, 4294901760
    %1380 = vmatprep.subr.mxu0 %v1379
    %v1381 = vand.u32 %v100, 4294901760
    %1382 = vmatpush1.msra.mxu0 %v1381
    %v1383 = vand.u32 %v103, 4294901760
    %1384 = vmatprep.subr.mxu0 %v1383
    %v1385 = vand.u32 %v102, 4294901760
    %1386 = vmatpush1.msra.mxu0 %v1385
    %v1387 = vand.u32 %v517, 4294901760
    %v1388 = vsub.f32 %v517, %v1387
    %v1389 = vand.u32 %v1388, 4294901760
    %1390 = vmatprep.mubr.f32.mxu0 %v1389
    %v1391 = vand.u32 %v413, 4294901760
    %v1392 = vsub.f32 %v413, %v1391
    %v1393 = vand.u32 %v1392, 4294901760
    %1394 = vmatmul.mubr.f32.gmra.mrb[0].mxu0 %v1393
    %v1395 = vpop.f32.mrb[0].mxu0
    %v1396 = vadd.f32 %v1255, %v1395
    %v1397 = vpop.f32.mrb[0].mxu0
    %v1398 = vadd.f32 %v1257, %v1397
    %1399 = vdwg.mxu0
    %v1400 = vand.u32 %v41, 4294901760
    %v1401 = vsub.f32 %v41, %v1400
    %v1402 = vand.u32 %v1401, 4294901760
    %1403 = vmatprep.subr.mxu0 %v1402
    %v1404 = vand.u32 %v40, 4294901760
    %v1405 = vsub.f32 %v40, %v1404
    %v1406 = vand.u32 %v1405, 4294901760
    %1407 = vmatpush1.msra.mxu0 %v1406
    %v1408 = vand.u32 %v43, 4294901760
    %v1409 = vsub.f32 %v43, %v1408
    %v1410 = vand.u32 %v1409, 4294901760
    %1411 = vmatprep.subr.mxu0 %v1410
    %v1412 = vand.u32 %v42, 4294901760
    %v1413 = vsub.f32 %v42, %v1412
    %v1414 = vand.u32 %v1413, 4294901760
    %1415 = vmatpush1.msra.mxu0 %v1414
    %v1416 = vand.u32 %v45, 4294901760
    %v1417 = vsub.f32 %v45, %v1416
    %v1418 = vand.u32 %v1417, 4294901760
    %1419 = vmatprep.subr.mxu0 %v1418
    %v1420 = vand.u32 %v44, 4294901760
    %v1421 = vsub.f32 %v44, %v1420
    %v1422 = vand.u32 %v1421, 4294901760
    %1423 = vmatpush1.msra.mxu0 %v1422
    %v1424 = vand.u32 %v47, 4294901760
    %v1425 = vsub.f32 %v47, %v1424
    %v1426 = vand.u32 %v1425, 4294901760
    %1427 = vmatprep.subr.mxu0 %v1426
    %v1428 = vand.u32 %v46, 4294901760
    %v1429 = vsub.f32 %v46, %v1428
    %v1430 = vand.u32 %v1429, 4294901760
    %1431 = vmatpush1.msra.mxu0 %v1430
    %v1432 = vand.u32 %v49, 4294901760
    %v1433 = vsub.f32 %v49, %v1432
    %v1434 = vand.u32 %v1433, 4294901760
    %1435 = vmatprep.subr.mxu0 %v1434
    %v1436 = vand.u32 %v48, 4294901760
    %v1437 = vsub.f32 %v48, %v1436
    %v1438 = vand.u32 %v1437, 4294901760
    %1439 = vmatpush1.msra.mxu0 %v1438
    %v1440 = vand.u32 %v51, 4294901760
    %v1441 = vsub.f32 %v51, %v1440
    %v1442 = vand.u32 %v1441, 4294901760
    %1443 = vmatprep.subr.mxu0 %v1442
    %v1444 = vand.u32 %v50, 4294901760
    %v1445 = vsub.f32 %v50, %v1444
    %v1446 = vand.u32 %v1445, 4294901760
    %1447 = vmatpush1.msra.mxu0 %v1446
    %v1448 = vand.u32 %v53, 4294901760
    %v1449 = vsub.f32 %v53, %v1448
    %v1450 = vand.u32 %v1449, 4294901760
    %1451 = vmatprep.subr.mxu0 %v1450
    %v1452 = vand.u32 %v52, 4294901760
    %v1453 = vsub.f32 %v52, %v1452
    %v1454 = vand.u32 %v1453, 4294901760
    %1455 = vmatpush1.msra.mxu0 %v1454
    %v1456 = vand.u32 %v55, 4294901760
    %v1457 = vsub.f32 %v55, %v1456
    %v1458 = vand.u32 %v1457, 4294901760
    %1459 = vmatprep.subr.mxu0 %v1458
    %v1460 = vand.u32 %v54, 4294901760
    %v1461 = vsub.f32 %v54, %v1460
    %v1462 = vand.u32 %v1461, 4294901760
    %1463 = vmatpush1.msra.mxu0 %v1462
    %v1464 = vand.u32 %v57, 4294901760
    %v1465 = vsub.f32 %v57, %v1464
    %v1466 = vand.u32 %v1465, 4294901760
    %1467 = vmatprep.subr.mxu0 %v1466
    %v1468 = vand.u32 %v56, 4294901760
    %v1469 = vsub.f32 %v56, %v1468
    %v1470 = vand.u32 %v1469, 4294901760
    %1471 = vmatpush1.msra.mxu0 %v1470
    %v1472 = vand.u32 %v59, 4294901760
    %v1473 = vsub.f32 %v59, %v1472
    %v1474 = vand.u32 %v1473, 4294901760
    %1475 = vmatprep.subr.mxu0 %v1474
    %v1476 = vand.u32 %v58, 4294901760
    %v1477 = vsub.f32 %v58, %v1476
    %v1478 = vand.u32 %v1477, 4294901760
    %1479 = vmatpush1.msra.mxu0 %v1478
    %v1480 = vand.u32 %v61, 4294901760
    %v1481 = vsub.f32 %v61, %v1480
    %v1482 = vand.u32 %v1481, 4294901760
    %1483 = vmatprep.subr.mxu0 %v1482
    %v1484 = vand.u32 %v60, 4294901760
    %v1485 = vsub.f32 %v60, %v1484
    %v1486 = vand.u32 %v1485, 4294901760
    %1487 = vmatpush1.msra.mxu0 %v1486
    %v1488 = vand.u32 %v63, 4294901760
    %v1489 = vsub.f32 %v63, %v1488
    %v1490 = vand.u32 %v1489, 4294901760
    %1491 = vmatprep.subr.mxu0 %v1490
    %v1492 = vand.u32 %v62, 4294901760
    %v1493 = vsub.f32 %v62, %v1492
    %v1494 = vand.u32 %v1493, 4294901760
    %1495 = vmatpush1.msra.mxu0 %v1494
    %v1496 = vand.u32 %v65, 4294901760
    %v1497 = vsub.f32 %v65, %v1496
    %v1498 = vand.u32 %v1497, 4294901760
    %1499 = vmatprep.subr.mxu0 %v1498
    %v1500 = vand.u32 %v64, 4294901760
    %v1501 = vsub.f32 %v64, %v1500
    %v1502 = vand.u32 %v1501, 4294901760
    %1503 = vmatpush1.msra.mxu0 %v1502
    %v1504 = vand.u32 %v67, 4294901760
    %v1505 = vsub.f32 %v67, %v1504
    %v1506 = vand.u32 %v1505, 4294901760
    %1507 = vmatprep.subr.mxu0 %v1506
    %v1508 = vand.u32 %v66, 4294901760
    %v1509 = vsub.f32 %v66, %v1508
    %v1510 = vand.u32 %v1509, 4294901760
    %1511 = vmatpush1.msra.mxu0 %v1510
    %v1512 = vand.u32 %v69, 4294901760
    %v1513 = vsub.f32 %v69, %v1512
    %v1514 = vand.u32 %v1513, 4294901760
    %1515 = vmatprep.subr.mxu0 %v1514
    %v1516 = vand.u32 %v68, 4294901760
    %v1517 = vsub.f32 %v68, %v1516
    %v1518 = vand.u32 %v1517, 4294901760
    %1519 = vmatpush1.msra.mxu0 %v1518
    %v1520 = vand.u32 %v71, 4294901760
    %v1521 = vsub.f32 %v71, %v1520
    %v1522 = vand.u32 %v1521, 4294901760
    %1523 = vmatprep.subr.mxu0 %v1522
    %v1524 = vand.u32 %v70, 4294901760
    %v1525 = vsub.f32 %v70, %v1524
    %v1526 = vand.u32 %v1525, 4294901760
    %1527 = vmatpush1.msra.mxu0 %v1526
    %v1528 = vand.u32 %v73, 4294901760
    %v1529 = vsub.f32 %v73, %v1528
    %v1530 = vand.u32 %v1529, 4294901760
    %1531 = vmatprep.subr.mxu0 %v1530
    %v1532 = vand.u32 %v72, 4294901760
    %v1533 = vsub.f32 %v72, %v1532
    %v1534 = vand.u32 %v1533, 4294901760
    %1535 = vmatpush1.msra.mxu0 %v1534
    %v1536 = vand.u32 %v75, 4294901760
    %v1537 = vsub.f32 %v75, %v1536
    %v1538 = vand.u32 %v1537, 4294901760
    %1539 = vmatprep.subr.mxu0 %v1538
    %v1540 = vand.u32 %v74, 4294901760
    %v1541 = vsub.f32 %v74, %v1540
    %v1542 = vand.u32 %v1541, 4294901760
    %1543 = vmatpush1.msra.mxu0 %v1542
    %v1544 = vand.u32 %v77, 4294901760
    %v1545 = vsub.f32 %v77, %v1544
    %v1546 = vand.u32 %v1545, 4294901760
    %1547 = vmatprep.subr.mxu0 %v1546
    %v1548 = vand.u32 %v76, 4294901760
    %v1549 = vsub.f32 %v76, %v1548
    %v1550 = vand.u32 %v1549, 4294901760
    %1551 = vmatpush1.msra.mxu0 %v1550
    %v1552 = vand.u32 %v79, 4294901760
    %v1553 = vsub.f32 %v79, %v1552
    %v1554 = vand.u32 %v1553, 4294901760
    %1555 = vmatprep.subr.mxu0 %v1554
    %v1556 = vand.u32 %v78, 4294901760
    %v1557 = vsub.f32 %v78, %v1556
    %v1558 = vand.u32 %v1557, 4294901760
    %1559 = vmatpush1.msra.mxu0 %v1558
    %v1560 = vand.u32 %v81, 4294901760
    %v1561 = vsub.f32 %v81, %v1560
    %v1562 = vand.u32 %v1561, 4294901760
    %1563 = vmatprep.subr.mxu0 %v1562
    %v1564 = vand.u32 %v80, 4294901760
    %v1565 = vsub.f32 %v80, %v1564
    %v1566 = vand.u32 %v1565, 4294901760
    %1567 = vmatpush1.msra.mxu0 %v1566
    %v1568 = vand.u32 %v83, 4294901760
    %v1569 = vsub.f32 %v83, %v1568
    %v1570 = vand.u32 %v1569, 4294901760
    %1571 = vmatprep.subr.mxu0 %v1570
    %v1572 = vand.u32 %v82, 4294901760
    %v1573 = vsub.f32 %v82, %v1572
    %v1574 = vand.u32 %v1573, 4294901760
    %1575 = vmatpush1.msra.mxu0 %v1574
    %v1576 = vand.u32 %v85, 4294901760
    %v1577 = vsub.f32 %v85, %v1576
    %v1578 = vand.u32 %v1577, 4294901760
    %1579 = vmatprep.subr.mxu0 %v1578
    %v1580 = vand.u32 %v84, 4294901760
    %v1581 = vsub.f32 %v84, %v1580
    %v1582 = vand.u32 %v1581, 4294901760
    %1583 = vmatpush1.msra.mxu0 %v1582
    %v1584 = vand.u32 %v87, 4294901760
    %v1585 = vsub.f32 %v87, %v1584
    %v1586 = vand.u32 %v1585, 4294901760
    %1587 = vmatprep.subr.mxu0 %v1586
    %v1588 = vand.u32 %v86, 4294901760
    %v1589 = vsub.f32 %v86, %v1588
    %v1590 = vand.u32 %v1589, 4294901760
    %1591 = vmatpush1.msra.mxu0 %v1590
    %v1592 = vand.u32 %v89, 4294901760
    %v1593 = vsub.f32 %v89, %v1592
    %v1594 = vand.u32 %v1593, 4294901760
    %1595 = vmatprep.subr.mxu0 %v1594
    %v1596 = vand.u32 %v88, 4294901760
    %v1597 = vsub.f32 %v88, %v1596
    %v1598 = vand.u32 %v1597, 4294901760
    %1599 = vmatpush1.msra.mxu0 %v1598
    %v1600 = vand.u32 %v91, 4294901760
    %v1601 = vsub.f32 %v91, %v1600
    %v1602 = vand.u32 %v1601, 4294901760
    %1603 = vmatprep.subr.mxu0 %v1602
    %v1604 = vand.u32 %v90, 4294901760
    %v1605 = vsub.f32 %v90, %v1604
    %v1606 = vand.u32 %v1605, 4294901760
    %1607 = vmatpush1.msra.mxu0 %v1606
    %v1608 = vand.u32 %v93, 4294901760
    %v1609 = vsub.f32 %v93, %v1608
    %v1610 = vand.u32 %v1609, 4294901760
    %1611 = vmatprep.subr.mxu0 %v1610
    %v1612 = vand.u32 %v92, 4294901760
    %v1613 = vsub.f32 %v92, %v1612
    %v1614 = vand.u32 %v1613, 4294901760
    %1615 = vmatpush1.msra.mxu0 %v1614
    %v1616 = vand.u32 %v95, 4294901760
    %v1617 = vsub.f32 %v95, %v1616
    %v1618 = vand.u32 %v1617, 4294901760
    %1619 = vmatprep.subr.mxu0 %v1618
    %v1620 = vand.u32 %v94, 4294901760
    %v1621 = vsub.f32 %v94, %v1620
    %v1622 = vand.u32 %v1621, 4294901760
    %1623 = vmatpush1.msra.mxu0 %v1622
    %v1624 = vand.u32 %v97, 4294901760
    %v1625 = vsub.f32 %v97, %v1624
    %v1626 = vand.u32 %v1625, 4294901760
    %1627 = vmatprep.subr.mxu0 %v1626
    %v1628 = vand.u32 %v96, 4294901760
    %v1629 = vsub.f32 %v96, %v1628
    %v1630 = vand.u32 %v1629, 4294901760
    %1631 = vmatpush1.msra.mxu0 %v1630
    %v1632 = vand.u32 %v99, 4294901760
    %v1633 = vsub.f32 %v99, %v1632
    %v1634 = vand.u32 %v1633, 4294901760
    %1635 = vmatprep.subr.mxu0 %v1634
    %v1636 = vand.u32 %v98, 4294901760
    %v1637 = vsub.f32 %v98, %v1636
    %v1638 = vand.u32 %v1637, 4294901760
    %1639 = vmatpush1.msra.mxu0 %v1638
    %v1640 = vand.u32 %v101, 4294901760
    %v1641 = vsub.f32 %v101, %v1640
    %v1642 = vand.u32 %v1641, 4294901760
    %1643 = vmatprep.subr.mxu0 %v1642
    %v1644 = vand.u32 %v100, 4294901760
    %v1645 = vsub.f32 %v100, %v1644
    %v1646 = vand.u32 %v1645, 4294901760
    %1647 = vmatpush1.msra.mxu0 %v1646
    %v1648 = vand.u32 %v103, 4294901760
    %v1649 = vsub.f32 %v103, %v1648
    %v1650 = vand.u32 %v1649, 4294901760
    %1651 = vmatprep.subr.mxu0 %v1650
    %v1652 = vand.u32 %v102, 4294901760
    %v1653 = vsub.f32 %v102, %v1652
    %v1654 = vand.u32 %v1653, 4294901760
    %1655 = vmatpush1.msra.mxu0 %v1654
    %v1656 = vand.u32 %v517, 4294901760
    %1657 = vmatprep.mubr.f32.mxu0 %v1656
    %v1658 = vand.u32 %v413, 4294901760
    %1659 = vmatmul.mubr.f32.gmra.mrb[0].mxu0 %v1658
    %v1660 = vpop.f32.mrb[0].mxu0
    %v1661 = vadd.f32 %v1396, %v1660
    %v1662 = vpop.f32.mrb[0].mxu0
    %v1663 = vadd.f32 %v1398, %v1662
    %1664 = vdwg.mxu0
    %v1665 = vand.u32 %v41, 4294901760
    %1666 = vmatprep.subr.mxu0 %v1665
    %v1667 = vand.u32 %v40, 4294901760
    %1668 = vmatpush1.msra.mxu0 %v1667
    %v1669 = vand.u32 %v43, 4294901760
    %1670 = vmatprep.subr.mxu0 %v1669
    %v1671 = vand.u32 %v42, 4294901760
    %1672 = vmatpush1.msra.mxu0 %v1671
    %v1673 = vand.u32 %v45, 4294901760
    %1674 = vmatprep.subr.mxu0 %v1673
    %v1675 = vand.u32 %v44, 4294901760
    %1676 = vmatpush1.msra.mxu0 %v1675
    %v1677 = vand.u32 %v47, 4294901760
    %1678 = vmatprep.subr.mxu0 %v1677
    %v1679 = vand.u32 %v46, 4294901760
    %1680 = vmatpush1.msra.mxu0 %v1679
    %v1681 = vand.u32 %v49, 4294901760
    %1682 = vmatprep.subr.mxu0 %v1681
    %v1683 = vand.u32 %v48, 4294901760
    %1684 = vmatpush1.msra.mxu0 %v1683
    %v1685 = vand.u32 %v51, 4294901760
    %1686 = vmatprep.subr.mxu0 %v1685
    %v1687 = vand.u32 %v50, 4294901760
    %1688 = vmatpush1.msra.mxu0 %v1687
    %v1689 = vand.u32 %v53, 4294901760
    %1690 = vmatprep.subr.mxu0 %v1689
    %v1691 = vand.u32 %v52, 4294901760
    %1692 = vmatpush1.msra.mxu0 %v1691
    %v1693 = vand.u32 %v55, 4294901760
    %1694 = vmatprep.subr.mxu0 %v1693
    %v1695 = vand.u32 %v54, 4294901760
    %1696 = vmatpush1.msra.mxu0 %v1695
    %v1697 = vand.u32 %v57, 4294901760
    %1698 = vmatprep.subr.mxu0 %v1697
    %v1699 = vand.u32 %v56, 4294901760
    %1700 = vmatpush1.msra.mxu0 %v1699
    %v1701 = vand.u32 %v59, 4294901760
    %1702 = vmatprep.subr.mxu0 %v1701
    %v1703 = vand.u32 %v58, 4294901760
    %1704 = vmatpush1.msra.mxu0 %v1703
    %v1705 = vand.u32 %v61, 4294901760
    %1706 = vmatprep.subr.mxu0 %v1705
    %v1707 = vand.u32 %v60, 4294901760
    %1708 = vmatpush1.msra.mxu0 %v1707
    %v1709 = vand.u32 %v63, 4294901760
    %1710 = vmatprep.subr.mxu0 %v1709
    %v1711 = vand.u32 %v62, 4294901760
    %1712 = vmatpush1.msra.mxu0 %v1711
    %v1713 = vand.u32 %v65, 4294901760
    %1714 = vmatprep.subr.mxu0 %v1713
    %v1715 = vand.u32 %v64, 4294901760
    %1716 = vmatpush1.msra.mxu0 %v1715
    %v1717 = vand.u32 %v67, 4294901760
    %1718 = vmatprep.subr.mxu0 %v1717
    %v1719 = vand.u32 %v66, 4294901760
    %1720 = vmatpush1.msra.mxu0 %v1719
    %v1721 = vand.u32 %v69, 4294901760
    %1722 = vmatprep.subr.mxu0 %v1721
    %v1723 = vand.u32 %v68, 4294901760
    %1724 = vmatpush1.msra.mxu0 %v1723
    %v1725 = vand.u32 %v71, 4294901760
    %1726 = vmatprep.subr.mxu0 %v1725
    %v1727 = vand.u32 %v70, 4294901760
    %1728 = vmatpush1.msra.mxu0 %v1727
    %v1729 = vand.u32 %v73, 4294901760
    %1730 = vmatprep.subr.mxu0 %v1729
    %v1731 = vand.u32 %v72, 4294901760
    %1732 = vmatpush1.msra.mxu0 %v1731
    %v1733 = vand.u32 %v75, 4294901760
    %1734 = vmatprep.subr.mxu0 %v1733
    %v1735 = vand.u32 %v74, 4294901760
    %1736 = vmatpush1.msra.mxu0 %v1735
    %v1737 = vand.u32 %v77, 4294901760
    %1738 = vmatprep.subr.mxu0 %v1737
    %v1739 = vand.u32 %v76, 4294901760
    %1740 = vmatpush1.msra.mxu0 %v1739
    %v1741 = vand.u32 %v79, 4294901760
    %1742 = vmatprep.subr.mxu0 %v1741
    %v1743 = vand.u32 %v78, 4294901760
    %1744 = vmatpush1.msra.mxu0 %v1743
    %v1745 = vand.u32 %v81, 4294901760
    %1746 = vmatprep.subr.mxu0 %v1745
    %v1747 = vand.u32 %v80, 4294901760
    %1748 = vmatpush1.msra.mxu0 %v1747
    %v1749 = vand.u32 %v83, 4294901760
    %1750 = vmatprep.subr.mxu0 %v1749
    %v1751 = vand.u32 %v82, 4294901760
    %1752 = vmatpush1.msra.mxu0 %v1751
    %v1753 = vand.u32 %v85, 4294901760
    %1754 = vmatprep.subr.mxu0 %v1753
    %v1755 = vand.u32 %v84, 4294901760
    %1756 = vmatpush1.msra.mxu0 %v1755
    %v1757 = vand.u32 %v87, 4294901760
    %1758 = vmatprep.subr.mxu0 %v1757
    %v1759 = vand.u32 %v86, 4294901760
    %1760 = vmatpush1.msra.mxu0 %v1759
    %v1761 = vand.u32 %v89, 4294901760
    %1762 = vmatprep.subr.mxu0 %v1761
    %v1763 = vand.u32 %v88, 4294901760
    %1764 = vmatpush1.msra.mxu0 %v1763
    %v1765 = vand.u32 %v91, 4294901760
    %1766 = vmatprep.subr.mxu0 %v1765
    %v1767 = vand.u32 %v90, 4294901760
    %1768 = vmatpush1.msra.mxu0 %v1767
    %v1769 = vand.u32 %v93, 4294901760
    %1770 = vmatprep.subr.mxu0 %v1769
    %v1771 = vand.u32 %v92, 4294901760
    %1772 = vmatpush1.msra.mxu0 %v1771
    %v1773 = vand.u32 %v95, 4294901760
    %1774 = vmatprep.subr.mxu0 %v1773
    %v1775 = vand.u32 %v94, 4294901760
    %1776 = vmatpush1.msra.mxu0 %v1775
    %v1777 = vand.u32 %v97, 4294901760
    %1778 = vmatprep.subr.mxu0 %v1777
    %v1779 = vand.u32 %v96, 4294901760
    %1780 = vmatpush1.msra.mxu0 %v1779
    %v1781 = vand.u32 %v99, 4294901760
    %1782 = vmatprep.subr.mxu0 %v1781
    %v1783 = vand.u32 %v98, 4294901760
    %1784 = vmatpush1.msra.mxu0 %v1783
    %v1785 = vand.u32 %v101, 4294901760
    %1786 = vmatprep.subr.mxu0 %v1785
    %v1787 = vand.u32 %v100, 4294901760
    %1788 = vmatpush1.msra.mxu0 %v1787
    %v1789 = vand.u32 %v103, 4294901760
    %1790 = vmatprep.subr.mxu0 %v1789
    %v1791 = vand.u32 %v102, 4294901760
    %1792 = vmatpush1.msra.mxu0 %v1791
    %v1793 = vand.u32 %v517, 4294901760
    %1794 = vmatprep.mubr.f32.mxu0 %v1793
    %v1795 = vand.u32 %v413, 4294901760
    %1796 = vmatmul.mubr.f32.gmra.mrb[0].mxu0 %v1795
    %v1797 = vpop.f32.mrb[0].mxu0
    %v1798 = vadd.f32 %v1661, %v1797
    %v1799 = vpop.f32.mrb[0].mxu0
    %v1800 = vadd.f32 %v1663, %v1799
    %1801 = vdwg.mxu0
    %v1802 = vand.u32 %v41, 4294901760
    %1803 = vmatprep.subr.mxu0 %v1802
    %v1804 = vand.u32 %v40, 4294901760
    %1805 = vmatpush1.msra.mxu0 %v1804
    %v1806 = vand.u32 %v43, 4294901760
    %1807 = vmatprep.subr.mxu0 %v1806
    %v1808 = vand.u32 %v42, 4294901760
    %1809 = vmatpush1.msra.mxu0 %v1808
    %v1810 = vand.u32 %v45, 4294901760
    %1811 = vmatprep.subr.mxu0 %v1810
    %v1812 = vand.u32 %v44, 4294901760
    %1813 = vmatpush1.msra.mxu0 %v1812
    %v1814 = vand.u32 %v47, 4294901760
    %1815 = vmatprep.subr.mxu0 %v1814
    %v1816 = vand.u32 %v46, 4294901760
    %1817 = vmatpush1.msra.mxu0 %v1816
    %v1818 = vand.u32 %v49, 4294901760
    %1819 = vmatprep.subr.mxu0 %v1818
    %v1820 = vand.u32 %v48, 4294901760
    %1821 = vmatpush1.msra.mxu0 %v1820
    %v1822 = vand.u32 %v51, 4294901760
    %1823 = vmatprep.subr.mxu0 %v1822
    %v1824 = vand.u32 %v50, 4294901760
    %1825 = vmatpush1.msra.mxu0 %v1824
    %v1826 = vand.u32 %v53, 4294901760
    %1827 = vmatprep.subr.mxu0 %v1826
    %v1828 = vand.u32 %v52, 4294901760
    %1829 = vmatpush1.msra.mxu0 %v1828
    %v1830 = vand.u32 %v55, 4294901760
    %1831 = vmatprep.subr.mxu0 %v1830
    %v1832 = vand.u32 %v54, 4294901760
    %1833 = vmatpush1.msra.mxu0 %v1832
    %v1834 = vand.u32 %v57, 4294901760
    %1835 = vmatprep.subr.mxu0 %v1834
    %v1836 = vand.u32 %v56, 4294901760
    %1837 = vmatpush1.msra.mxu0 %v1836
    %v1838 = vand.u32 %v59, 4294901760
    %1839 = vmatprep.subr.mxu0 %v1838
    %v1840 = vand.u32 %v58, 4294901760
    %1841 = vmatpush1.msra.mxu0 %v1840
    %v1842 = vand.u32 %v61, 4294901760
    %1843 = vmatprep.subr.mxu0 %v1842
    %v1844 = vand.u32 %v60, 4294901760
    %1845 = vmatpush1.msra.mxu0 %v1844
    %v1846 = vand.u32 %v63, 4294901760
    %1847 = vmatprep.subr.mxu0 %v1846
    %v1848 = vand.u32 %v62, 4294901760
    %1849 = vmatpush1.msra.mxu0 %v1848
    %v1850 = vand.u32 %v65, 4294901760
    %1851 = vmatprep.subr.mxu0 %v1850
    %v1852 = vand.u32 %v64, 4294901760
    %1853 = vmatpush1.msra.mxu0 %v1852
    %v1854 = vand.u32 %v67, 4294901760
    %1855 = vmatprep.subr.mxu0 %v1854
    %v1856 = vand.u32 %v66, 4294901760
    %1857 = vmatpush1.msra.mxu0 %v1856
    %v1858 = vand.u32 %v69, 4294901760
    %1859 = vmatprep.subr.mxu0 %v1858
    %v1860 = vand.u32 %v68, 4294901760
    %1861 = vmatpush1.msra.mxu0 %v1860
    %v1862 = vand.u32 %v71, 4294901760
    %1863 = vmatprep.subr.mxu0 %v1862
    %v1864 = vand.u32 %v70, 4294901760
    %1865 = vmatpush1.msra.mxu0 %v1864
    %v1866 = vand.u32 %v73, 4294901760
    %1867 = vmatprep.subr.mxu0 %v1866
    %v1868 = vand.u32 %v72, 4294901760
    %1869 = vmatpush1.msra.mxu0 %v1868
    %v1870 = vand.u32 %v75, 4294901760
    %1871 = vmatprep.subr.mxu0 %v1870
    %v1872 = vand.u32 %v74, 4294901760
    %1873 = vmatpush1.msra.mxu0 %v1872
    %v1874 = vand.u32 %v77, 4294901760
    %1875 = vmatprep.subr.mxu0 %v1874
    %v1876 = vand.u32 %v76, 4294901760
    %1877 = vmatpush1.msra.mxu0 %v1876
    %v1878 = vand.u32 %v79, 4294901760
    %1879 = vmatprep.subr.mxu0 %v1878
    %v1880 = vand.u32 %v78, 4294901760
    %1881 = vmatpush1.msra.mxu0 %v1880
    %v1882 = vand.u32 %v81, 4294901760
    %1883 = vmatprep.subr.mxu0 %v1882
    %v1884 = vand.u32 %v80, 4294901760
    %1885 = vmatpush1.msra.mxu0 %v1884
    %v1886 = vand.u32 %v83, 4294901760
    %1887 = vmatprep.subr.mxu0 %v1886
    %v1888 = vand.u32 %v82, 4294901760
    %1889 = vmatpush1.msra.mxu0 %v1888
    %v1890 = vand.u32 %v85, 4294901760
    %1891 = vmatprep.subr.mxu0 %v1890
    %v1892 = vand.u32 %v84, 4294901760
    %1893 = vmatpush1.msra.mxu0 %v1892
    %v1894 = vand.u32 %v87, 4294901760
    %1895 = vmatprep.subr.mxu0 %v1894
    %v1896 = vand.u32 %v86, 4294901760
    %1897 = vmatpush1.msra.mxu0 %v1896
    %v1898 = vand.u32 %v89, 4294901760
    %1899 = vmatprep.subr.mxu0 %v1898
    %v1900 = vand.u32 %v88, 4294901760
    %1901 = vmatpush1.msra.mxu0 %v1900
    %v1902 = vand.u32 %v91, 4294901760
    %1903 = vmatprep.subr.mxu0 %v1902
    %v1904 = vand.u32 %v90, 4294901760
    %1905 = vmatpush1.msra.mxu0 %v1904
    %v1906 = vand.u32 %v93, 4294901760
    %1907 = vmatprep.subr.mxu0 %v1906
    %v1908 = vand.u32 %v92, 4294901760
    %1909 = vmatpush1.msra.mxu0 %v1908
    %v1910 = vand.u32 %v95, 4294901760
    %1911 = vmatprep.subr.mxu0 %v1910
    %v1912 = vand.u32 %v94, 4294901760
    %1913 = vmatpush1.msra.mxu0 %v1912
    %v1914 = vand.u32 %v97, 4294901760
    %1915 = vmatprep.subr.mxu0 %v1914
    %v1916 = vand.u32 %v96, 4294901760
    %1917 = vmatpush1.msra.mxu0 %v1916
    %v1918 = vand.u32 %v99, 4294901760
    %1919 = vmatprep.subr.mxu0 %v1918
    %v1920 = vand.u32 %v98, 4294901760
    %1921 = vmatpush1.msra.mxu0 %v1920
    %v1922 = vand.u32 %v101, 4294901760
    %1923 = vmatprep.subr.mxu0 %v1922
    %v1924 = vand.u32 %v100, 4294901760
    %1925 = vmatpush1.msra.mxu0 %v1924
    %v1926 = vand.u32 %v103, 4294901760
    %1927 = vmatprep.subr.mxu0 %v1926
    %v1928 = vand.u32 %v102, 4294901760
    %1929 = vmatpush1.msra.mxu0 %v1928
    %v1930 = vand.u32 %v309, 4294901760
    %v1931 = vsub.f32 %v309, %v1930
    %v1932 = vand.u32 %v1931, 4294901760
    %v1933 = vsub.f32 %v1931, %v1932
    %v1934 = vand.u32 %v1933, 4294901760
    %1935 = vmatprep.mubr.f32.mxu0 %v1934
    %v1936 = vand.u32 %v206, 4294901760
    %v1937 = vsub.f32 %v206, %v1936
    %v1938 = vand.u32 %v1937, 4294901760
    %v1939 = vsub.f32 %v1937, %v1938
    %v1940 = vand.u32 %v1939, 4294901760
    %1941 = vmatmul.mubr.f32.gmra.mrb[0].mxu0 %v1940
    %v1942 = vpop.f32.mrb[0].mxu0
    %v1943 = vadd.f32 0.0, %v1942
    %v1944 = vpop.f32.mrb[0].mxu0
    %v1945 = vadd.f32 0.0, %v1944
    %1946 = vdwg.mxu0
    %v1947 = vand.u32 %v41, 4294901760
    %v1948 = vsub.f32 %v41, %v1947
    %v1949 = vand.u32 %v1948, 4294901760
    %v1950 = vsub.f32 %v1948, %v1949
    %v1951 = vand.u32 %v1950, 4294901760
    %1952 = vmatprep.subr.mxu0 %v1951
    %v1953 = vand.u32 %v40, 4294901760
    %v1954 = vsub.f32 %v40, %v1953
    %v1955 = vand.u32 %v1954, 4294901760
    %v1956 = vsub.f32 %v1954, %v1955
    %v1957 = vand.u32 %v1956, 4294901760
    %1958 = vmatpush1.msra.mxu0 %v1957
    %v1959 = vand.u32 %v43, 4294901760
    %v1960 = vsub.f32 %v43, %v1959
    %v1961 = vand.u32 %v1960, 4294901760
    %v1962 = vsub.f32 %v1960, %v1961
    %v1963 = vand.u32 %v1962, 4294901760
    %1964 = vmatprep.subr.mxu0 %v1963
    %v1965 = vand.u32 %v42, 4294901760
    %v1966 = vsub.f32 %v42, %v1965
    %v1967 = vand.u32 %v1966, 4294901760
    %v1968 = vsub.f32 %v1966, %v1967
    %v1969 = vand.u32 %v1968, 4294901760
    %1970 = vmatpush1.msra.mxu0 %v1969
    %v1971 = vand.u32 %v45, 4294901760
    %v1972 = vsub.f32 %v45, %v1971
    %v1973 = vand.u32 %v1972, 4294901760
    %v1974 = vsub.f32 %v1972, %v1973
    %v1975 = vand.u32 %v1974, 4294901760
    %1976 = vmatprep.subr.mxu0 %v1975
    %v1977 = vand.u32 %v44, 4294901760
    %v1978 = vsub.f32 %v44, %v1977
    %v1979 = vand.u32 %v1978, 4294901760
    %v1980 = vsub.f32 %v1978, %v1979
    %v1981 = vand.u32 %v1980, 4294901760
    %1982 = vmatpush1.msra.mxu0 %v1981
    %v1983 = vand.u32 %v47, 4294901760
    %v1984 = vsub.f32 %v47, %v1983
    %v1985 = vand.u32 %v1984, 4294901760
    %v1986 = vsub.f32 %v1984, %v1985
    %v1987 = vand.u32 %v1986, 4294901760
    %1988 = vmatprep.subr.mxu0 %v1987
    %v1989 = vand.u32 %v46, 4294901760
    %v1990 = vsub.f32 %v46, %v1989
    %v1991 = vand.u32 %v1990, 4294901760
    %v1992 = vsub.f32 %v1990, %v1991
    %v1993 = vand.u32 %v1992, 4294901760
    %1994 = vmatpush1.msra.mxu0 %v1993
    %v1995 = vand.u32 %v49, 4294901760
    %v1996 = vsub.f32 %v49, %v1995
    %v1997 = vand.u32 %v1996, 4294901760
    %v1998 = vsub.f32 %v1996, %v1997
    %v1999 = vand.u32 %v1998, 4294901760
    %2000 = vmatprep.subr.mxu0 %v1999
    %v2001 = vand.u32 %v48, 4294901760
    %v2002 = vsub.f32 %v48, %v2001
    %v2003 = vand.u32 %v2002, 4294901760
    %v2004 = vsub.f32 %v2002, %v2003
    %v2005 = vand.u32 %v2004, 4294901760
    %2006 = vmatpush1.msra.mxu0 %v2005
    %v2007 = vand.u32 %v51, 4294901760
    %v2008 = vsub.f32 %v51, %v2007
    %v2009 = vand.u32 %v2008, 4294901760
    %v2010 = vsub.f32 %v2008, %v2009
    %v2011 = vand.u32 %v2010, 4294901760
    %2012 = vmatprep.subr.mxu0 %v2011
    %v2013 = vand.u32 %v50, 4294901760
    %v2014 = vsub.f32 %v50, %v2013
    %v2015 = vand.u32 %v2014, 4294901760
    %v2016 = vsub.f32 %v2014, %v2015
    %v2017 = vand.u32 %v2016, 4294901760
    %2018 = vmatpush1.msra.mxu0 %v2017
    %v2019 = vand.u32 %v53, 4294901760
    %v2020 = vsub.f32 %v53, %v2019
    %v2021 = vand.u32 %v2020, 4294901760
    %v2022 = vsub.f32 %v2020, %v2021
    %v2023 = vand.u32 %v2022, 4294901760
    %2024 = vmatprep.subr.mxu0 %v2023
    %v2025 = vand.u32 %v52, 4294901760
    %v2026 = vsub.f32 %v52, %v2025
    %v2027 = vand.u32 %v2026, 4294901760
    %v2028 = vsub.f32 %v2026, %v2027
    %v2029 = vand.u32 %v2028, 4294901760
    %2030 = vmatpush1.msra.mxu0 %v2029
    %v2031 = vand.u32 %v55, 4294901760
    %v2032 = vsub.f32 %v55, %v2031
    %v2033 = vand.u32 %v2032, 4294901760
    %v2034 = vsub.f32 %v2032, %v2033
    %v2035 = vand.u32 %v2034, 4294901760
    %2036 = vmatprep.subr.mxu0 %v2035
    %v2037 = vand.u32 %v54, 4294901760
    %v2038 = vsub.f32 %v54, %v2037
    %v2039 = vand.u32 %v2038, 4294901760
    %v2040 = vsub.f32 %v2038, %v2039
    %v2041 = vand.u32 %v2040, 4294901760
    %2042 = vmatpush1.msra.mxu0 %v2041
    %v2043 = vand.u32 %v57, 4294901760
    %v2044 = vsub.f32 %v57, %v2043
    %v2045 = vand.u32 %v2044, 4294901760
    %v2046 = vsub.f32 %v2044, %v2045
    %v2047 = vand.u32 %v2046, 4294901760
    %2048 = vmatprep.subr.mxu0 %v2047
    %v2049 = vand.u32 %v56, 4294901760
    %v2050 = vsub.f32 %v56, %v2049
    %v2051 = vand.u32 %v2050, 4294901760
    %v2052 = vsub.f32 %v2050, %v2051
    %v2053 = vand.u32 %v2052, 4294901760
    %2054 = vmatpush1.msra.mxu0 %v2053
    %v2055 = vand.u32 %v59, 4294901760
    %v2056 = vsub.f32 %v59, %v2055
    %v2057 = vand.u32 %v2056, 4294901760
    %v2058 = vsub.f32 %v2056, %v2057
    %v2059 = vand.u32 %v2058, 4294901760
    %2060 = vmatprep.subr.mxu0 %v2059
    %v2061 = vand.u32 %v58, 4294901760
    %v2062 = vsub.f32 %v58, %v2061
    %v2063 = vand.u32 %v2062, 4294901760
    %v2064 = vsub.f32 %v2062, %v2063
    %v2065 = vand.u32 %v2064, 4294901760
    %2066 = vmatpush1.msra.mxu0 %v2065
    %v2067 = vand.u32 %v61, 4294901760
    %v2068 = vsub.f32 %v61, %v2067
    %v2069 = vand.u32 %v2068, 4294901760
    %v2070 = vsub.f32 %v2068, %v2069
    %v2071 = vand.u32 %v2070, 4294901760
    %2072 = vmatprep.subr.mxu0 %v2071
    %v2073 = vand.u32 %v60, 4294901760
    %v2074 = vsub.f32 %v60, %v2073
    %v2075 = vand.u32 %v2074, 4294901760
    %v2076 = vsub.f32 %v2074, %v2075
    %v2077 = vand.u32 %v2076, 4294901760
    %2078 = vmatpush1.msra.mxu0 %v2077
    %v2079 = vand.u32 %v63, 4294901760
    %v2080 = vsub.f32 %v63, %v2079
    %v2081 = vand.u32 %v2080, 4294901760
    %v2082 = vsub.f32 %v2080, %v2081
    %v2083 = vand.u32 %v2082, 4294901760
    %2084 = vmatprep.subr.mxu0 %v2083
    %v2085 = vand.u32 %v62, 4294901760
    %v2086 = vsub.f32 %v62, %v2085
    %v2087 = vand.u32 %v2086, 4294901760
    %v2088 = vsub.f32 %v2086, %v2087
    %v2089 = vand.u32 %v2088, 4294901760
    %2090 = vmatpush1.msra.mxu0 %v2089
    %v2091 = vand.u32 %v65, 4294901760
    %v2092 = vsub.f32 %v65, %v2091
    %v2093 = vand.u32 %v2092, 4294901760
    %v2094 = vsub.f32 %v2092, %v2093
    %v2095 = vand.u32 %v2094, 4294901760
    %2096 = vmatprep.subr.mxu0 %v2095
    %v2097 = vand.u32 %v64, 4294901760
    %v2098 = vsub.f32 %v64, %v2097
    %v2099 = vand.u32 %v2098, 4294901760
    %v2100 = vsub.f32 %v2098, %v2099
    %v2101 = vand.u32 %v2100, 4294901760
    %2102 = vmatpush1.msra.mxu0 %v2101
    %v2103 = vand.u32 %v67, 4294901760
    %v2104 = vsub.f32 %v67, %v2103
    %v2105 = vand.u32 %v2104, 4294901760
    %v2106 = vsub.f32 %v2104, %v2105
    %v2107 = vand.u32 %v2106, 4294901760
    %2108 = vmatprep.subr.mxu0 %v2107
    %v2109 = vand.u32 %v66, 4294901760
    %v2110 = vsub.f32 %v66, %v2109
    %v2111 = vand.u32 %v2110, 4294901760
    %v2112 = vsub.f32 %v2110, %v2111
    %v2113 = vand.u32 %v2112, 4294901760
    %2114 = vmatpush1.msra.mxu0 %v2113
    %v2115 = vand.u32 %v69, 4294901760
    %v2116 = vsub.f32 %v69, %v2115
    %v2117 = vand.u32 %v2116, 4294901760
    %v2118 = vsub.f32 %v2116, %v2117
    %v2119 = vand.u32 %v2118, 4294901760
    %2120 = vmatprep.subr.mxu0 %v2119
    %v2121 = vand.u32 %v68, 4294901760
    %v2122 = vsub.f32 %v68, %v2121
    %v2123 = vand.u32 %v2122, 4294901760
    %v2124 = vsub.f32 %v2122, %v2123
    %v2125 = vand.u32 %v2124, 4294901760
    %2126 = vmatpush1.msra.mxu0 %v2125
    %v2127 = vand.u32 %v71, 4294901760
    %v2128 = vsub.f32 %v71, %v2127
    %v2129 = vand.u32 %v2128, 4294901760
    %v2130 = vsub.f32 %v2128, %v2129
    %v2131 = vand.u32 %v2130, 4294901760
    %2132 = vmatprep.subr.mxu0 %v2131
    %v2133 = vand.u32 %v70, 4294901760
    %v2134 = vsub.f32 %v70, %v2133
    %v2135 = vand.u32 %v2134, 4294901760
    %v2136 = vsub.f32 %v2134, %v2135
    %v2137 = vand.u32 %v2136, 4294901760
    %2138 = vmatpush1.msra.mxu0 %v2137
    %v2139 = vand.u32 %v73, 4294901760
    %v2140 = vsub.f32 %v73, %v2139
    %v2141 = vand.u32 %v2140, 4294901760
    %v2142 = vsub.f32 %v2140, %v2141
    %v2143 = vand.u32 %v2142, 4294901760
    %2144 = vmatprep.subr.mxu0 %v2143
    %v2145 = vand.u32 %v72, 4294901760
    %v2146 = vsub.f32 %v72, %v2145
    %v2147 = vand.u32 %v2146, 4294901760
    %v2148 = vsub.f32 %v2146, %v2147
    %v2149 = vand.u32 %v2148, 4294901760
    %2150 = vmatpush1.msra.mxu0 %v2149
    %v2151 = vand.u32 %v75, 4294901760
    %v2152 = vsub.f32 %v75, %v2151
    %v2153 = vand.u32 %v2152, 4294901760
    %v2154 = vsub.f32 %v2152, %v2153
    %v2155 = vand.u32 %v2154, 4294901760
    %2156 = vmatprep.subr.mxu0 %v2155
    %v2157 = vand.u32 %v74, 4294901760
    %v2158 = vsub.f32 %v74, %v2157
    %v2159 = vand.u32 %v2158, 4294901760
    %v2160 = vsub.f32 %v2158, %v2159
    %v2161 = vand.u32 %v2160, 4294901760
    %2162 = vmatpush1.msra.mxu0 %v2161
    %v2163 = vand.u32 %v77, 4294901760
    %v2164 = vsub.f32 %v77, %v2163
    %v2165 = vand.u32 %v2164, 4294901760
    %v2166 = vsub.f32 %v2164, %v2165
    %v2167 = vand.u32 %v2166, 4294901760
    %2168 = vmatprep.subr.mxu0 %v2167
    %v2169 = vand.u32 %v76, 4294901760
    %v2170 = vsub.f32 %v76, %v2169
    %v2171 = vand.u32 %v2170, 4294901760
    %v2172 = vsub.f32 %v2170, %v2171
    %v2173 = vand.u32 %v2172, 4294901760
    %2174 = vmatpush1.msra.mxu0 %v2173
    %v2175 = vand.u32 %v79, 4294901760
    %v2176 = vsub.f32 %v79, %v2175
    %v2177 = vand.u32 %v2176, 4294901760
    %v2178 = vsub.f32 %v2176, %v2177
    %v2179 = vand.u32 %v2178, 4294901760
    %2180 = vmatprep.subr.mxu0 %v2179
    %v2181 = vand.u32 %v78, 4294901760
    %v2182 = vsub.f32 %v78, %v2181
    %v2183 = vand.u32 %v2182, 4294901760
    %v2184 = vsub.f32 %v2182, %v2183
    %v2185 = vand.u32 %v2184, 4294901760
    %2186 = vmatpush1.msra.mxu0 %v2185
    %v2187 = vand.u32 %v81, 4294901760
    %v2188 = vsub.f32 %v81, %v2187
    %v2189 = vand.u32 %v2188, 4294901760
    %v2190 = vsub.f32 %v2188, %v2189
    %v2191 = vand.u32 %v2190, 4294901760
    %2192 = vmatprep.subr.mxu0 %v2191
    %v2193 = vand.u32 %v80, 4294901760
    %v2194 = vsub.f32 %v80, %v2193
    %v2195 = vand.u32 %v2194, 4294901760
    %v2196 = vsub.f32 %v2194, %v2195
    %v2197 = vand.u32 %v2196, 4294901760
    %2198 = vmatpush1.msra.mxu0 %v2197
    %v2199 = vand.u32 %v83, 4294901760
    %v2200 = vsub.f32 %v83, %v2199
    %v2201 = vand.u32 %v2200, 4294901760
    %v2202 = vsub.f32 %v2200, %v2201
    %v2203 = vand.u32 %v2202, 4294901760
    %2204 = vmatprep.subr.mxu0 %v2203
    %v2205 = vand.u32 %v82, 4294901760
    %v2206 = vsub.f32 %v82, %v2205
    %v2207 = vand.u32 %v2206, 4294901760
    %v2208 = vsub.f32 %v2206, %v2207
    %v2209 = vand.u32 %v2208, 4294901760
    %2210 = vmatpush1.msra.mxu0 %v2209
    %v2211 = vand.u32 %v85, 4294901760
    %v2212 = vsub.f32 %v85, %v2211
    %v2213 = vand.u32 %v2212, 4294901760
    %v2214 = vsub.f32 %v2212, %v2213
    %v2215 = vand.u32 %v2214, 4294901760
    %2216 = vmatprep.subr.mxu0 %v2215
    %v2217 = vand.u32 %v84, 4294901760
    %v2218 = vsub.f32 %v84, %v2217
    %v2219 = vand.u32 %v2218, 4294901760
    %v2220 = vsub.f32 %v2218, %v2219
    %v2221 = vand.u32 %v2220, 4294901760
    %2222 = vmatpush1.msra.mxu0 %v2221
    %v2223 = vand.u32 %v87, 4294901760
    %v2224 = vsub.f32 %v87, %v2223
    %v2225 = vand.u32 %v2224, 4294901760
    %v2226 = vsub.f32 %v2224, %v2225
    %v2227 = vand.u32 %v2226, 4294901760
    %2228 = vmatprep.subr.mxu0 %v2227
    %v2229 = vand.u32 %v86, 4294901760
    %v2230 = vsub.f32 %v86, %v2229
    %v2231 = vand.u32 %v2230, 4294901760
    %v2232 = vsub.f32 %v2230, %v2231
    %v2233 = vand.u32 %v2232, 4294901760
    %2234 = vmatpush1.msra.mxu0 %v2233
    %v2235 = vand.u32 %v89, 4294901760
    %v2236 = vsub.f32 %v89, %v2235
    %v2237 = vand.u32 %v2236, 4294901760
    %v2238 = vsub.f32 %v2236, %v2237
    %v2239 = vand.u32 %v2238, 4294901760
    %2240 = vmatprep.subr.mxu0 %v2239
    %v2241 = vand.u32 %v88, 4294901760
    %v2242 = vsub.f32 %v88, %v2241
    %v2243 = vand.u32 %v2242, 4294901760
    %v2244 = vsub.f32 %v2242, %v2243
    %v2245 = vand.u32 %v2244, 4294901760
    %2246 = vmatpush1.msra.mxu0 %v2245
    %v2247 = vand.u32 %v91, 4294901760
    %v2248 = vsub.f32 %v91, %v2247
    %v2249 = vand.u32 %v2248, 4294901760
    %v2250 = vsub.f32 %v2248, %v2249
    %v2251 = vand.u32 %v2250, 4294901760
    %2252 = vmatprep.subr.mxu0 %v2251
    %v2253 = vand.u32 %v90, 4294901760
    %v2254 = vsub.f32 %v90, %v2253
    %v2255 = vand.u32 %v2254, 4294901760
    %v2256 = vsub.f32 %v2254, %v2255
    %v2257 = vand.u32 %v2256, 4294901760
    %2258 = vmatpush1.msra.mxu0 %v2257
    %v2259 = vand.u32 %v93, 4294901760
    %v2260 = vsub.f32 %v93, %v2259
    %v2261 = vand.u32 %v2260, 4294901760
    %v2262 = vsub.f32 %v2260, %v2261
    %v2263 = vand.u32 %v2262, 4294901760
    %2264 = vmatprep.subr.mxu0 %v2263
    %v2265 = vand.u32 %v92, 4294901760
    %v2266 = vsub.f32 %v92, %v2265
    %v2267 = vand.u32 %v2266, 4294901760
    %v2268 = vsub.f32 %v2266, %v2267
    %v2269 = vand.u32 %v2268, 4294901760
    %2270 = vmatpush1.msra.mxu0 %v2269
    %v2271 = vand.u32 %v95, 4294901760
    %v2272 = vsub.f32 %v95, %v2271
    %v2273 = vand.u32 %v2272, 4294901760
    %v2274 = vsub.f32 %v2272, %v2273
    %v2275 = vand.u32 %v2274, 4294901760
    %2276 = vmatprep.subr.mxu0 %v2275
    %v2277 = vand.u32 %v94, 4294901760
    %v2278 = vsub.f32 %v94, %v2277
    %v2279 = vand.u32 %v2278, 4294901760
    %v2280 = vsub.f32 %v2278, %v2279
    %v2281 = vand.u32 %v2280, 4294901760
    %2282 = vmatpush1.msra.mxu0 %v2281
    %v2283 = vand.u32 %v97, 4294901760
    %v2284 = vsub.f32 %v97, %v2283
    %v2285 = vand.u32 %v2284, 4294901760
    %v2286 = vsub.f32 %v2284, %v2285
    %v2287 = vand.u32 %v2286, 4294901760
    %2288 = vmatprep.subr.mxu0 %v2287
    %v2289 = vand.u32 %v96, 4294901760
    %v2290 = vsub.f32 %v96, %v2289
    %v2291 = vand.u32 %v2290, 4294901760
    %v2292 = vsub.f32 %v2290, %v2291
    %v2293 = vand.u32 %v2292, 4294901760
    %2294 = vmatpush1.msra.mxu0 %v2293
    %v2295 = vand.u32 %v99, 4294901760
    %v2296 = vsub.f32 %v99, %v2295
    %v2297 = vand.u32 %v2296, 4294901760
    %v2298 = vsub.f32 %v2296, %v2297
    %v2299 = vand.u32 %v2298, 4294901760
    %2300 = vmatprep.subr.mxu0 %v2299
    %v2301 = vand.u32 %v98, 4294901760
    %v2302 = vsub.f32 %v98, %v2301
    %v2303 = vand.u32 %v2302, 4294901760
    %v2304 = vsub.f32 %v2302, %v2303
    %v2305 = vand.u32 %v2304, 4294901760
    %2306 = vmatpush1.msra.mxu0 %v2305
    %v2307 = vand.u32 %v101, 4294901760
    %v2308 = vsub.f32 %v101, %v2307
    %v2309 = vand.u32 %v2308, 4294901760
    %v2310 = vsub.f32 %v2308, %v2309
    %v2311 = vand.u32 %v2310, 4294901760
    %2312 = vmatprep.subr.mxu0 %v2311
    %v2313 = vand.u32 %v100, 4294901760
    %v2314 = vsub.f32 %v100, %v2313
    %v2315 = vand.u32 %v2314, 4294901760
    %v2316 = vsub.f32 %v2314, %v2315
    %v2317 = vand.u32 %v2316, 4294901760
    %2318 = vmatpush1.msra.mxu0 %v2317
    %v2319 = vand.u32 %v103, 4294901760
    %v2320 = vsub.f32 %v103, %v2319
    %v2321 = vand.u32 %v2320, 4294901760
    %v2322 = vsub.f32 %v2320, %v2321
    %v2323 = vand.u32 %v2322, 4294901760
    %2324 = vmatprep.subr.mxu0 %v2323
    %v2325 = vand.u32 %v102, 4294901760
    %v2326 = vsub.f32 %v102, %v2325
    %v2327 = vand.u32 %v2326, 4294901760
    %v2328 = vsub.f32 %v2326, %v2327
    %v2329 = vand.u32 %v2328, 4294901760
    %2330 = vmatpush1.msra.mxu0 %v2329
    %v2331 = vand.u32 %v309, 4294901760
    %2332 = vmatprep.mubr.f32.mxu0 %v2331
    %v2333 = vand.u32 %v206, 4294901760
    %2334 = vmatmul.mubr.f32.gmra.mrb[0].mxu0 %v2333
    %v2335 = vpop.f32.mrb[0].mxu0
    %v2336 = vadd.f32 %v1943, %v2335
    %v2337 = vpop.f32.mrb[0].mxu0
    %v2338 = vadd.f32 %v1945, %v2337
    %2339 = vdwg.mxu0
    %v2340 = vand.u32 %v41, 4294901760
    %v2341 = vsub.f32 %v41, %v2340
    %2342 = vmatprep.subr.mxu0 %v2341
    %v2343 = vand.u32 %v40, 4294901760
    %v2344 = vsub.f32 %v40, %v2343
    %2345 = vmatpush1.msra.mxu0 %v2344
    %v2346 = vand.u32 %v43, 4294901760
    %v2347 = vsub.f32 %v43, %v2346
    %2348 = vmatprep.subr.mxu0 %v2347
    %v2349 = vand.u32 %v42, 4294901760
    %v2350 = vsub.f32 %v42, %v2349
    %2351 = vmatpush1.msra.mxu0 %v2350
    %v2352 = vand.u32 %v45, 4294901760
    %v2353 = vsub.f32 %v45, %v2352
    %2354 = vmatprep.subr.mxu0 %v2353
    %v2355 = vand.u32 %v44, 4294901760
    %v2356 = vsub.f32 %v44, %v2355
    %2357 = vmatpush1.msra.mxu0 %v2356
    %v2358 = vand.u32 %v47, 4294901760
    %v2359 = vsub.f32 %v47, %v2358
    %2360 = vmatprep.subr.mxu0 %v2359
    %v2361 = vand.u32 %v46, 4294901760
    %v2362 = vsub.f32 %v46, %v2361
    %2363 = vmatpush1.msra.mxu0 %v2362
    %v2364 = vand.u32 %v49, 4294901760
    %v2365 = vsub.f32 %v49, %v2364
    %2366 = vmatprep.subr.mxu0 %v2365
    %v2367 = vand.u32 %v48, 4294901760
    %v2368 = vsub.f32 %v48, %v2367
    %2369 = vmatpush1.msra.mxu0 %v2368
    %v2370 = vand.u32 %v51, 4294901760
    %v2371 = vsub.f32 %v51, %v2370
    %2372 = vmatprep.subr.mxu0 %v2371
    %v2373 = vand.u32 %v50, 4294901760
    %v2374 = vsub.f32 %v50, %v2373
    %2375 = vmatpush1.msra.mxu0 %v2374
    %v2376 = vand.u32 %v53, 4294901760
    %v2377 = vsub.f32 %v53, %v2376
    %2378 = vmatprep.subr.mxu0 %v2377
    %v2379 = vand.u32 %v52, 4294901760
    %v2380 = vsub.f32 %v52, %v2379
    %2381 = vmatpush1.msra.mxu0 %v2380
    %v2382 = vand.u32 %v55, 4294901760
    %v2383 = vsub.f32 %v55, %v2382
    %2384 = vmatprep.subr.mxu0 %v2383
    %v2385 = vand.u32 %v54, 4294901760
    %v2386 = vsub.f32 %v54, %v2385
    %2387 = vmatpush1.msra.mxu0 %v2386
    %v2388 = vand.u32 %v57, 4294901760
    %v2389 = vsub.f32 %v57, %v2388
    %2390 = vmatprep.subr.mxu0 %v2389
    %v2391 = vand.u32 %v56, 4294901760
    %v2392 = vsub.f32 %v56, %v2391
    %2393 = vmatpush1.msra.mxu0 %v2392
    %v2394 = vand.u32 %v59, 4294901760
    %v2395 = vsub.f32 %v59, %v2394
    %2396 = vmatprep.subr.mxu0 %v2395
    %v2397 = vand.u32 %v58, 4294901760
    %v2398 = vsub.f32 %v58, %v2397
    %2399 = vmatpush1.msra.mxu0 %v2398
    %v2400 = vand.u32 %v61, 4294901760
    %v2401 = vsub.f32 %v61, %v2400
    %2402 = vmatprep.subr.mxu0 %v2401
    %v2403 = vand.u32 %v60, 4294901760
    %v2404 = vsub.f32 %v60, %v2403
    %2405 = vmatpush1.msra.mxu0 %v2404
    %v2406 = vand.u32 %v63, 4294901760
    %v2407 = vsub.f32 %v63, %v2406
    %2408 = vmatprep.subr.mxu0 %v2407
    %v2409 = vand.u32 %v62, 4294901760
    %v2410 = vsub.f32 %v62, %v2409
    %2411 = vmatpush1.msra.mxu0 %v2410
    %v2412 = vand.u32 %v65, 4294901760
    %v2413 = vsub.f32 %v65, %v2412
    %2414 = vmatprep.subr.mxu0 %v2413
    %v2415 = vand.u32 %v64, 4294901760
    %v2416 = vsub.f32 %v64, %v2415
    %2417 = vmatpush1.msra.mxu0 %v2416
    %v2418 = vand.u32 %v67, 4294901760
    %v2419 = vsub.f32 %v67, %v2418
    %2420 = vmatprep.subr.mxu0 %v2419
    %v2421 = vand.u32 %v66, 4294901760
    %v2422 = vsub.f32 %v66, %v2421
    %2423 = vmatpush1.msra.mxu0 %v2422
    %v2424 = vand.u32 %v69, 4294901760
    %v2425 = vsub.f32 %v69, %v2424
    %2426 = vmatprep.subr.mxu0 %v2425
    %v2427 = vand.u32 %v68, 4294901760
    %v2428 = vsub.f32 %v68, %v2427
    %2429 = vmatpush1.msra.mxu0 %v2428
    %v2430 = vand.u32 %v71, 4294901760
    %v2431 = vsub.f32 %v71, %v2430
    %2432 = vmatprep.subr.mxu0 %v2431
    %v2433 = vand.u32 %v70, 4294901760
    %v2434 = vsub.f32 %v70, %v2433
    %2435 = vmatpush1.msra.mxu0 %v2434
    %v2436 = vand.u32 %v73, 4294901760
    %v2437 = vsub.f32 %v73, %v2436
    %2438 = vmatprep.subr.mxu0 %v2437
    %v2439 = vand.u32 %v72, 4294901760
    %v2440 = vsub.f32 %v72, %v2439
    %2441 = vmatpush1.msra.mxu0 %v2440
    %v2442 = vand.u32 %v75, 4294901760
    %v2443 = vsub.f32 %v75, %v2442
    %2444 = vmatprep.subr.mxu0 %v2443
    %v2445 = vand.u32 %v74, 4294901760
    %v2446 = vsub.f32 %v74, %v2445
    %2447 = vmatpush1.msra.mxu0 %v2446
    %v2448 = vand.u32 %v77, 4294901760
    %v2449 = vsub.f32 %v77, %v2448
    %2450 = vmatprep.subr.mxu0 %v2449
    %v2451 = vand.u32 %v76, 4294901760
    %v2452 = vsub.f32 %v76, %v2451
    %2453 = vmatpush1.msra.mxu0 %v2452
    %v2454 = vand.u32 %v79, 4294901760
    %v2455 = vsub.f32 %v79, %v2454
    %2456 = vmatprep.subr.mxu0 %v2455
    %v2457 = vand.u32 %v78, 4294901760
    %v2458 = vsub.f32 %v78, %v2457
    %2459 = vmatpush1.msra.mxu0 %v2458
    %v2460 = vand.u32 %v81, 4294901760
    %v2461 = vsub.f32 %v81, %v2460
    %2462 = vmatprep.subr.mxu0 %v2461
    %v2463 = vand.u32 %v80, 4294901760
    %v2464 = vsub.f32 %v80, %v2463
    %2465 = vmatpush1.msra.mxu0 %v2464
    %v2466 = vand.u32 %v83, 4294901760
    %v2467 = vsub.f32 %v83, %v2466
    %2468 = vmatprep.subr.mxu0 %v2467
    %v2469 = vand.u32 %v82, 4294901760
    %v2470 = vsub.f32 %v82, %v2469
    %2471 = vmatpush1.msra.mxu0 %v2470
    %v2472 = vand.u32 %v85, 4294901760
    %v2473 = vsub.f32 %v85, %v2472
    %2474 = vmatprep.subr.mxu0 %v2473
    %v2475 = vand.u32 %v84, 4294901760
    %v2476 = vsub.f32 %v84, %v2475
    %2477 = vmatpush1.msra.mxu0 %v2476
    %v2478 = vand.u32 %v87, 4294901760
    %v2479 = vsub.f32 %v87, %v2478
    %2480 = vmatprep.subr.mxu0 %v2479
    %v2481 = vand.u32 %v86, 4294901760
    %v2482 = vsub.f32 %v86, %v2481
    %2483 = vmatpush1.msra.mxu0 %v2482
    %v2484 = vand.u32 %v89, 4294901760
    %v2485 = vsub.f32 %v89, %v2484
    %2486 = vmatprep.subr.mxu0 %v2485
    %v2487 = vand.u32 %v88, 4294901760
    %v2488 = vsub.f32 %v88, %v2487
    %2489 = vmatpush1.msra.mxu0 %v2488
    %v2490 = vand.u32 %v91, 4294901760
    %v2491 = vsub.f32 %v91, %v2490
    %2492 = vmatprep.subr.mxu0 %v2491
    %v2493 = vand.u32 %v90, 4294901760
    %v2494 = vsub.f32 %v90, %v2493
    %2495 = vmatpush1.msra.mxu0 %v2494
    %v2496 = vand.u32 %v93, 4294901760
    %v2497 = vsub.f32 %v93, %v2496
    %2498 = vmatprep.subr.mxu0 %v2497
    %v2499 = vand.u32 %v92, 4294901760
    %v2500 = vsub.f32 %v92, %v2499
    %2501 = vmatpush1.msra.mxu0 %v2500
    %v2502 = vand.u32 %v95, 4294901760
    %v2503 = vsub.f32 %v95, %v2502
    %2504 = vmatprep.subr.mxu0 %v2503
    %v2505 = vand.u32 %v94, 4294901760
    %v2506 = vsub.f32 %v94, %v2505
    %2507 = vmatpush1.msra.mxu0 %v2506
    %v2508 = vand.u32 %v97, 4294901760
    %v2509 = vsub.f32 %v97, %v2508
    %2510 = vmatprep.subr.mxu0 %v2509
    %v2511 = vand.u32 %v96, 4294901760
    %v2512 = vsub.f32 %v96, %v2511
    %2513 = vmatpush1.msra.mxu0 %v2512
    %v2514 = vand.u32 %v99, 4294901760
    %v2515 = vsub.f32 %v99, %v2514
    %2516 = vmatprep.subr.mxu0 %v2515
    %v2517 = vand.u32 %v98, 4294901760
    %v2518 = vsub.f32 %v98, %v2517
    %2519 = vmatpush1.msra.mxu0 %v2518
    %v2520 = vand.u32 %v101, 4294901760
    %v2521 = vsub.f32 %v101, %v2520
    %2522 = vmatprep.subr.mxu0 %v2521
    %v2523 = vand.u32 %v100, 4294901760
    %v2524 = vsub.f32 %v100, %v2523
    %2525 = vmatpush1.msra.mxu0 %v2524
    %v2526 = vand.u32 %v103, 4294901760
    %v2527 = vsub.f32 %v103, %v2526
    %2528 = vmatprep.subr.mxu0 %v2527
    %v2529 = vand.u32 %v102, 4294901760
    %v2530 = vsub.f32 %v102, %v2529
    %2531 = vmatpush1.msra.mxu0 %v2530
    %v2532 = vand.u32 %v309, 4294901760
    %v2533 = vsub.f32 %v309, %v2532
    %2534 = vmatprep.mubr.f32.mxu0 %v2533
    %v2535 = vand.u32 %v206, 4294901760
    %v2536 = vsub.f32 %v206, %v2535
    %2537 = vmatmul.mubr.f32.gmra.mrb[0].mxu0 %v2536
    %v2538 = vpop.f32.mrb[0].mxu0
    %v2539 = vadd.f32 %v2336, %v2538
    %v2540 = vpop.f32.mrb[0].mxu0
    %v2541 = vadd.f32 %v2338, %v2540
    %2542 = vdwg.mxu0
    %v2543 = vand.u32 %v41, 4294901760
    %2544 = vmatprep.subr.mxu0 %v2543
    %v2545 = vand.u32 %v40, 4294901760
    %2546 = vmatpush1.msra.mxu0 %v2545
    %v2547 = vand.u32 %v43, 4294901760
    %2548 = vmatprep.subr.mxu0 %v2547
    %v2549 = vand.u32 %v42, 4294901760
    %2550 = vmatpush1.msra.mxu0 %v2549
    %v2551 = vand.u32 %v45, 4294901760
    %2552 = vmatprep.subr.mxu0 %v2551
    %v2553 = vand.u32 %v44, 4294901760
    %2554 = vmatpush1.msra.mxu0 %v2553
    %v2555 = vand.u32 %v47, 4294901760
    %2556 = vmatprep.subr.mxu0 %v2555
    %v2557 = vand.u32 %v46, 4294901760
    %2558 = vmatpush1.msra.mxu0 %v2557
    %v2559 = vand.u32 %v49, 4294901760
    %2560 = vmatprep.subr.mxu0 %v2559
    %v2561 = vand.u32 %v48, 4294901760
    %2562 = vmatpush1.msra.mxu0 %v2561
    %v2563 = vand.u32 %v51, 4294901760
    %2564 = vmatprep.subr.mxu0 %v2563
    %v2565 = vand.u32 %v50, 4294901760
    %2566 = vmatpush1.msra.mxu0 %v2565
    %v2567 = vand.u32 %v53, 4294901760
    %2568 = vmatprep.subr.mxu0 %v2567
    %v2569 = vand.u32 %v52, 4294901760
    %2570 = vmatpush1.msra.mxu0 %v2569
    %v2571 = vand.u32 %v55, 4294901760
    %2572 = vmatprep.subr.mxu0 %v2571
    %v2573 = vand.u32 %v54, 4294901760
    %2574 = vmatpush1.msra.mxu0 %v2573
    %v2575 = vand.u32 %v57, 4294901760
    %2576 = vmatprep.subr.mxu0 %v2575
    %v2577 = vand.u32 %v56, 4294901760
    %2578 = vmatpush1.msra.mxu0 %v2577
    %v2579 = vand.u32 %v59, 4294901760
    %2580 = vmatprep.subr.mxu0 %v2579
    %v2581 = vand.u32 %v58, 4294901760
    %2582 = vmatpush1.msra.mxu0 %v2581
    %v2583 = vand.u32 %v61, 4294901760
    %2584 = vmatprep.subr.mxu0 %v2583
    %v2585 = vand.u32 %v60, 4294901760
    %2586 = vmatpush1.msra.mxu0 %v2585
    %v2587 = vand.u32 %v63, 4294901760
    %2588 = vmatprep.subr.mxu0 %v2587
    %v2589 = vand.u32 %v62, 4294901760
    %2590 = vmatpush1.msra.mxu0 %v2589
    %v2591 = vand.u32 %v65, 4294901760
    %2592 = vmatprep.subr.mxu0 %v2591
    %v2593 = vand.u32 %v64, 4294901760
    %2594 = vmatpush1.msra.mxu0 %v2593
    %v2595 = vand.u32 %v67, 4294901760
    %2596 = vmatprep.subr.mxu0 %v2595
    %v2597 = vand.u32 %v66, 4294901760
    %2598 = vmatpush1.msra.mxu0 %v2597
    %v2599 = vand.u32 %v69, 4294901760
    %2600 = vmatprep.subr.mxu0 %v2599
    %v2601 = vand.u32 %v68, 4294901760
    %2602 = vmatpush1.msra.mxu0 %v2601
    %v2603 = vand.u32 %v71, 4294901760
    %2604 = vmatprep.subr.mxu0 %v2603
    %v2605 = vand.u32 %v70, 4294901760
    %2606 = vmatpush1.msra.mxu0 %v2605
    %v2607 = vand.u32 %v73, 4294901760
    %2608 = vmatprep.subr.mxu0 %v2607
    %v2609 = vand.u32 %v72, 4294901760
    %2610 = vmatpush1.msra.mxu0 %v2609
    %v2611 = vand.u32 %v75, 4294901760
    %2612 = vmatprep.subr.mxu0 %v2611
    %v2613 = vand.u32 %v74, 4294901760
    %2614 = vmatpush1.msra.mxu0 %v2613
    %v2615 = vand.u32 %v77, 4294901760
    %2616 = vmatprep.subr.mxu0 %v2615
    %v2617 = vand.u32 %v76, 4294901760
    %2618 = vmatpush1.msra.mxu0 %v2617
    %v2619 = vand.u32 %v79, 4294901760
    %2620 = vmatprep.subr.mxu0 %v2619
    %v2621 = vand.u32 %v78, 4294901760
    %2622 = vmatpush1.msra.mxu0 %v2621
    %v2623 = vand.u32 %v81, 4294901760
    %2624 = vmatprep.subr.mxu0 %v2623
    %v2625 = vand.u32 %v80, 4294901760
    %2626 = vmatpush1.msra.mxu0 %v2625
    %v2627 = vand.u32 %v83, 4294901760
    %2628 = vmatprep.subr.mxu0 %v2627
    %v2629 = vand.u32 %v82, 4294901760
    %2630 = vmatpush1.msra.mxu0 %v2629
    %v2631 = vand.u32 %v85, 4294901760
    %2632 = vmatprep.subr.mxu0 %v2631
    %v2633 = vand.u32 %v84, 4294901760
    %2634 = vmatpush1.msra.mxu0 %v2633
    %v2635 = vand.u32 %v87, 4294901760
    %2636 = vmatprep.subr.mxu0 %v2635
    %v2637 = vand.u32 %v86, 4294901760
    %2638 = vmatpush1.msra.mxu0 %v2637
    %v2639 = vand.u32 %v89, 4294901760
    %2640 = vmatprep.subr.mxu0 %v2639
    %v2641 = vand.u32 %v88, 4294901760
    %2642 = vmatpush1.msra.mxu0 %v2641
    %v2643 = vand.u32 %v91, 4294901760
    %2644 = vmatprep.subr.mxu0 %v2643
    %v2645 = vand.u32 %v90, 4294901760
    %2646 = vmatpush1.msra.mxu0 %v2645
    %v2647 = vand.u32 %v93, 4294901760
    %2648 = vmatprep.subr.mxu0 %v2647
    %v2649 = vand.u32 %v92, 4294901760
    %2650 = vmatpush1.msra.mxu0 %v2649
    %v2651 = vand.u32 %v95, 4294901760
    %2652 = vmatprep.subr.mxu0 %v2651
    %v2653 = vand.u32 %v94, 4294901760
    %2654 = vmatpush1.msra.mxu0 %v2653
    %v2655 = vand.u32 %v97, 4294901760
    %2656 = vmatprep.subr.mxu0 %v2655
    %v2657 = vand.u32 %v96, 4294901760
    %2658 = vmatpush1.msra.mxu0 %v2657
    %v2659 = vand.u32 %v99, 4294901760
    %2660 = vmatprep.subr.mxu0 %v2659
    %v2661 = vand.u32 %v98, 4294901760
    %2662 = vmatpush1.msra.mxu0 %v2661
    %v2663 = vand.u32 %v101, 4294901760
    %2664 = vmatprep.subr.mxu0 %v2663
    %v2665 = vand.u32 %v100, 4294901760
    %2666 = vmatpush1.msra.mxu0 %v2665
    %v2667 = vand.u32 %v103, 4294901760
    %2668 = vmatprep.subr.mxu0 %v2667
    %v2669 = vand.u32 %v102, 4294901760
    %2670 = vmatpush1.msra.mxu0 %v2669
    %v2671 = vand.u32 %v309, 4294901760
    %v2672 = vsub.f32 %v309, %v2671
    %v2673 = vand.u32 %v2672, 4294901760
    %2674 = vmatprep.mubr.f32.mxu0 %v2673
    %v2675 = vand.u32 %v206, 4294901760
    %v2676 = vsub.f32 %v206, %v2675
    %v2677 = vand.u32 %v2676, 4294901760
    %2678 = vmatmul.mubr.f32.gmra.mrb[0].mxu0 %v2677
    %v2679 = vpop.f32.mrb[0].mxu0
    %v2680 = vadd.f32 %v2539, %v2679
    %v2681 = vpop.f32.mrb[0].mxu0
    %v2682 = vadd.f32 %v2541, %v2681
    %2683 = vdwg.mxu0
    %v2684 = vand.u32 %v41, 4294901760
    %v2685 = vsub.f32 %v41, %v2684
    %v2686 = vand.u32 %v2685, 4294901760
    %2687 = vmatprep.subr.mxu0 %v2686
    %v2688 = vand.u32 %v40, 4294901760
    %v2689 = vsub.f32 %v40, %v2688
    %v2690 = vand.u32 %v2689, 4294901760
    %2691 = vmatpush1.msra.mxu0 %v2690
    %v2692 = vand.u32 %v43, 4294901760
    %v2693 = vsub.f32 %v43, %v2692
    %v2694 = vand.u32 %v2693, 4294901760
    %2695 = vmatprep.subr.mxu0 %v2694
    %v2696 = vand.u32 %v42, 4294901760
    %v2697 = vsub.f32 %v42, %v2696
    %v2698 = vand.u32 %v2697, 4294901760
    %2699 = vmatpush1.msra.mxu0 %v2698
    %v2700 = vand.u32 %v45, 4294901760
    %v2701 = vsub.f32 %v45, %v2700
    %v2702 = vand.u32 %v2701, 4294901760
    %2703 = vmatprep.subr.mxu0 %v2702
    %v2704 = vand.u32 %v44, 4294901760
    %v2705 = vsub.f32 %v44, %v2704
    %v2706 = vand.u32 %v2705, 4294901760
    %2707 = vmatpush1.msra.mxu0 %v2706
    %v2708 = vand.u32 %v47, 4294901760
    %v2709 = vsub.f32 %v47, %v2708
    %v2710 = vand.u32 %v2709, 4294901760
    %2711 = vmatprep.subr.mxu0 %v2710
    %v2712 = vand.u32 %v46, 4294901760
    %v2713 = vsub.f32 %v46, %v2712
    %v2714 = vand.u32 %v2713, 4294901760
    %2715 = vmatpush1.msra.mxu0 %v2714
    %v2716 = vand.u32 %v49, 4294901760
    %v2717 = vsub.f32 %v49, %v2716
    %v2718 = vand.u32 %v2717, 4294901760
    %2719 = vmatprep.subr.mxu0 %v2718
    %v2720 = vand.u32 %v48, 4294901760
    %v2721 = vsub.f32 %v48, %v2720
    %v2722 = vand.u32 %v2721, 4294901760
    %2723 = vmatpush1.msra.mxu0 %v2722
    %v2724 = vand.u32 %v51, 4294901760
    %v2725 = vsub.f32 %v51, %v2724
    %v2726 = vand.u32 %v2725, 4294901760
    %2727 = vmatprep.subr.mxu0 %v2726
    %v2728 = vand.u32 %v50, 4294901760
    %v2729 = vsub.f32 %v50, %v2728
    %v2730 = vand.u32 %v2729, 4294901760
    %2731 = vmatpush1.msra.mxu0 %v2730
    %v2732 = vand.u32 %v53, 4294901760
    %v2733 = vsub.f32 %v53, %v2732
    %v2734 = vand.u32 %v2733, 4294901760
    %2735 = vmatprep.subr.mxu0 %v2734
    %v2736 = vand.u32 %v52, 4294901760
    %v2737 = vsub.f32 %v52, %v2736
    %v2738 = vand.u32 %v2737, 4294901760
    %2739 = vmatpush1.msra.mxu0 %v2738
    %v2740 = vand.u32 %v55, 4294901760
    %v2741 = vsub.f32 %v55, %v2740
    %v2742 = vand.u32 %v2741, 4294901760
    %2743 = vmatprep.subr.mxu0 %v2742
    %v2744 = vand.u32 %v54, 4294901760
    %v2745 = vsub.f32 %v54, %v2744
    %v2746 = vand.u32 %v2745, 4294901760
    %2747 = vmatpush1.msra.mxu0 %v2746
    %v2748 = vand.u32 %v57, 4294901760
    %v2749 = vsub.f32 %v57, %v2748
    %v2750 = vand.u32 %v2749, 4294901760
    %2751 = vmatprep.subr.mxu0 %v2750
    %v2752 = vand.u32 %v56, 4294901760
    %v2753 = vsub.f32 %v56, %v2752
    %v2754 = vand.u32 %v2753, 4294901760
    %2755 = vmatpush1.msra.mxu0 %v2754
    %v2756 = vand.u32 %v59, 4294901760
    %v2757 = vsub.f32 %v59, %v2756
    %v2758 = vand.u32 %v2757, 4294901760
    %2759 = vmatprep.subr.mxu0 %v2758
    %v2760 = vand.u32 %v58, 4294901760
    %v2761 = vsub.f32 %v58, %v2760
    %v2762 = vand.u32 %v2761, 4294901760
    %2763 = vmatpush1.msra.mxu0 %v2762
    %v2764 = vand.u32 %v61, 4294901760
    %v2765 = vsub.f32 %v61, %v2764
    %v2766 = vand.u32 %v2765, 4294901760
    %2767 = vmatprep.subr.mxu0 %v2766
    %v2768 = vand.u32 %v60, 4294901760
    %v2769 = vsub.f32 %v60, %v2768
    %v2770 = vand.u32 %v2769, 4294901760
    %2771 = vmatpush1.msra.mxu0 %v2770
    %v2772 = vand.u32 %v63, 4294901760
    %v2773 = vsub.f32 %v63, %v2772
    %v2774 = vand.u32 %v2773, 4294901760
    %2775 = vmatprep.subr.mxu0 %v2774
    %v2776 = vand.u32 %v62, 4294901760
    %v2777 = vsub.f32 %v62, %v2776
    %v2778 = vand.u32 %v2777, 4294901760
    %2779 = vmatpush1.msra.mxu0 %v2778
    %v2780 = vand.u32 %v65, 4294901760
    %v2781 = vsub.f32 %v65, %v2780
    %v2782 = vand.u32 %v2781, 4294901760
    %2783 = vmatprep.subr.mxu0 %v2782
    %v2784 = vand.u32 %v64, 4294901760
    %v2785 = vsub.f32 %v64, %v2784
    %v2786 = vand.u32 %v2785, 4294901760
    %2787 = vmatpush1.msra.mxu0 %v2786
    %v2788 = vand.u32 %v67, 4294901760
    %v2789 = vsub.f32 %v67, %v2788
    %v2790 = vand.u32 %v2789, 4294901760
    %2791 = vmatprep.subr.mxu0 %v2790
    %v2792 = vand.u32 %v66, 4294901760
    %v2793 = vsub.f32 %v66, %v2792
    %v2794 = vand.u32 %v2793, 4294901760
    %2795 = vmatpush1.msra.mxu0 %v2794
    %v2796 = vand.u32 %v69, 4294901760
    %v2797 = vsub.f32 %v69, %v2796
    %v2798 = vand.u32 %v2797, 4294901760
    %2799 = vmatprep.subr.mxu0 %v2798
    %v2800 = vand.u32 %v68, 4294901760
    %v2801 = vsub.f32 %v68, %v2800
    %v2802 = vand.u32 %v2801, 4294901760
    %2803 = vmatpush1.msra.mxu0 %v2802
    %v2804 = vand.u32 %v71, 4294901760
    %v2805 = vsub.f32 %v71, %v2804
    %v2806 = vand.u32 %v2805, 4294901760
    %2807 = vmatprep.subr.mxu0 %v2806
    %v2808 = vand.u32 %v70, 4294901760
    %v2809 = vsub.f32 %v70, %v2808
    %v2810 = vand.u32 %v2809, 4294901760
    %2811 = vmatpush1.msra.mxu0 %v2810
    %v2812 = vand.u32 %v73, 4294901760
    %v2813 = vsub.f32 %v73, %v2812
    %v2814 = vand.u32 %v2813, 4294901760
    %2815 = vmatprep.subr.mxu0 %v2814
    %v2816 = vand.u32 %v72, 4294901760
    %v2817 = vsub.f32 %v72, %v2816
    %v2818 = vand.u32 %v2817, 4294901760
    %2819 = vmatpush1.msra.mxu0 %v2818
    %v2820 = vand.u32 %v75, 4294901760
    %v2821 = vsub.f32 %v75, %v2820
    %v2822 = vand.u32 %v2821, 4294901760
    %2823 = vmatprep.subr.mxu0 %v2822
    %v2824 = vand.u32 %v74, 4294901760
    %v2825 = vsub.f32 %v74, %v2824
    %v2826 = vand.u32 %v2825, 4294901760
    %2827 = vmatpush1.msra.mxu0 %v2826
    %v2828 = vand.u32 %v77, 4294901760
    %v2829 = vsub.f32 %v77, %v2828
    %v2830 = vand.u32 %v2829, 4294901760
    %2831 = vmatprep.subr.mxu0 %v2830
    %v2832 = vand.u32 %v76, 4294901760
    %v2833 = vsub.f32 %v76, %v2832
    %v2834 = vand.u32 %v2833, 4294901760
    %2835 = vmatpush1.msra.mxu0 %v2834
    %v2836 = vand.u32 %v79, 4294901760
    %v2837 = vsub.f32 %v79, %v2836
    %v2838 = vand.u32 %v2837, 4294901760
    %2839 = vmatprep.subr.mxu0 %v2838
    %v2840 = vand.u32 %v78, 4294901760
    %v2841 = vsub.f32 %v78, %v2840
    %v2842 = vand.u32 %v2841, 4294901760
    %2843 = vmatpush1.msra.mxu0 %v2842
    %v2844 = vand.u32 %v81, 4294901760
    %v2845 = vsub.f32 %v81, %v2844
    %v2846 = vand.u32 %v2845, 4294901760
    %2847 = vmatprep.subr.mxu0 %v2846
    %v2848 = vand.u32 %v80, 4294901760
    %v2849 = vsub.f32 %v80, %v2848
    %v2850 = vand.u32 %v2849, 4294901760
    %2851 = vmatpush1.msra.mxu0 %v2850
    %v2852 = vand.u32 %v83, 4294901760
    %v2853 = vsub.f32 %v83, %v2852
    %v2854 = vand.u32 %v2853, 4294901760
    %2855 = vmatprep.subr.mxu0 %v2854
    %v2856 = vand.u32 %v82, 4294901760
    %v2857 = vsub.f32 %v82, %v2856
    %v2858 = vand.u32 %v2857, 4294901760
    %2859 = vmatpush1.msra.mxu0 %v2858
    %v2860 = vand.u32 %v85, 4294901760
    %v2861 = vsub.f32 %v85, %v2860
    %v2862 = vand.u32 %v2861, 4294901760
    %2863 = vmatprep.subr.mxu0 %v2862
    %v2864 = vand.u32 %v84, 4294901760
    %v2865 = vsub.f32 %v84, %v2864
    %v2866 = vand.u32 %v2865, 4294901760
    %2867 = vmatpush1.msra.mxu0 %v2866
    %v2868 = vand.u32 %v87, 4294901760
    %v2869 = vsub.f32 %v87, %v2868
    %v2870 = vand.u32 %v2869, 4294901760
    %2871 = vmatprep.subr.mxu0 %v2870
    %v2872 = vand.u32 %v86, 4294901760
    %v2873 = vsub.f32 %v86, %v2872
    %v2874 = vand.u32 %v2873, 4294901760
    %2875 = vmatpush1.msra.mxu0 %v2874
    %v2876 = vand.u32 %v89, 4294901760
    %v2877 = vsub.f32 %v89, %v2876
    %v2878 = vand.u32 %v2877, 4294901760
    %2879 = vmatprep.subr.mxu0 %v2878
    %v2880 = vand.u32 %v88, 4294901760
    %v2881 = vsub.f32 %v88, %v2880
    %v2882 = vand.u32 %v2881, 4294901760
    %2883 = vmatpush1.msra.mxu0 %v2882
    %v2884 = vand.u32 %v91, 4294901760
    %v2885 = vsub.f32 %v91, %v2884
    %v2886 = vand.u32 %v2885, 4294901760
    %2887 = vmatprep.subr.mxu0 %v2886
    %v2888 = vand.u32 %v90, 4294901760
    %v2889 = vsub.f32 %v90, %v2888
    %v2890 = vand.u32 %v2889, 4294901760
    %2891 = vmatpush1.msra.mxu0 %v2890
    %v2892 = vand.u32 %v93, 4294901760
    %v2893 = vsub.f32 %v93, %v2892
    %v2894 = vand.u32 %v2893, 4294901760
    %2895 = vmatprep.subr.mxu0 %v2894
    %v2896 = vand.u32 %v92, 4294901760
    %v2897 = vsub.f32 %v92, %v2896
    %v2898 = vand.u32 %v2897, 4294901760
    %2899 = vmatpush1.msra.mxu0 %v2898
    %v2900 = vand.u32 %v95, 4294901760
    %v2901 = vsub.f32 %v95, %v2900
    %v2902 = vand.u32 %v2901, 4294901760
    %2903 = vmatprep.subr.mxu0 %v2902
    %v2904 = vand.u32 %v94, 4294901760
    %v2905 = vsub.f32 %v94, %v2904
    %v2906 = vand.u32 %v2905, 4294901760
    %2907 = vmatpush1.msra.mxu0 %v2906
    %v2908 = vand.u32 %v97, 4294901760
    %v2909 = vsub.f32 %v97, %v2908
    %v2910 = vand.u32 %v2909, 4294901760
    %2911 = vmatprep.subr.mxu0 %v2910
    %v2912 = vand.u32 %v96, 4294901760
    %v2913 = vsub.f32 %v96, %v2912
    %v2914 = vand.u32 %v2913, 4294901760
    %2915 = vmatpush1.msra.mxu0 %v2914
    %v2916 = vand.u32 %v99, 4294901760
    %v2917 = vsub.f32 %v99, %v2916
    %v2918 = vand.u32 %v2917, 4294901760
    %2919 = vmatprep.subr.mxu0 %v2918
    %v2920 = vand.u32 %v98, 4294901760
    %v2921 = vsub.f32 %v98, %v2920
    %v2922 = vand.u32 %v2921, 4294901760
    %2923 = vmatpush1.msra.mxu0 %v2922
    %v2924 = vand.u32 %v101, 4294901760
    %v2925 = vsub.f32 %v101, %v2924
    %v2926 = vand.u32 %v2925, 4294901760
    %2927 = vmatprep.subr.mxu0 %v2926
    %v2928 = vand.u32 %v100, 4294901760
    %v2929 = vsub.f32 %v100, %v2928
    %v2930 = vand.u32 %v2929, 4294901760
    %2931 = vmatpush1.msra.mxu0 %v2930
    %v2932 = vand.u32 %v103, 4294901760
    %v2933 = vsub.f32 %v103, %v2932
    %v2934 = vand.u32 %v2933, 4294901760
    %2935 = vmatprep.subr.mxu0 %v2934
    %v2936 = vand.u32 %v102, 4294901760
    %v2937 = vsub.f32 %v102, %v2936
    %v2938 = vand.u32 %v2937, 4294901760
    %2939 = vmatpush1.msra.mxu0 %v2938
    %v2940 = vand.u32 %v309, 4294901760
    %2941 = vmatprep.mubr.f32.mxu0 %v2940
    %v2942 = vand.u32 %v206, 4294901760
    %2943 = vmatmul.mubr.f32.gmra.mrb[0].mxu0 %v2942
    %v2944 = vpop.f32.mrb[0].mxu0
    %v2945 = vadd.f32 %v2680, %v2944
    %v2946 = vpop.f32.mrb[0].mxu0
    %v2947 = vadd.f32 %v2682, %v2946
    %2948 = vdwg.mxu0
    %v2949 = vand.u32 %v41, 4294901760
    %2950 = vmatprep.subr.mxu0 %v2949
    %v2951 = vand.u32 %v40, 4294901760
    %2952 = vmatpush1.msra.mxu0 %v2951
    %v2953 = vand.u32 %v43, 4294901760
    %2954 = vmatprep.subr.mxu0 %v2953
    %v2955 = vand.u32 %v42, 4294901760
    %2956 = vmatpush1.msra.mxu0 %v2955
    %v2957 = vand.u32 %v45, 4294901760
    %2958 = vmatprep.subr.mxu0 %v2957
    %v2959 = vand.u32 %v44, 4294901760
    %2960 = vmatpush1.msra.mxu0 %v2959
    %v2961 = vand.u32 %v47, 4294901760
    %2962 = vmatprep.subr.mxu0 %v2961
    %v2963 = vand.u32 %v46, 4294901760
    %2964 = vmatpush1.msra.mxu0 %v2963
    %v2965 = vand.u32 %v49, 4294901760
    %2966 = vmatprep.subr.mxu0 %v2965
    %v2967 = vand.u32 %v48, 4294901760
    %2968 = vmatpush1.msra.mxu0 %v2967
    %v2969 = vand.u32 %v51, 4294901760
    %2970 = vmatprep.subr.mxu0 %v2969
    %v2971 = vand.u32 %v50, 4294901760
    %2972 = vmatpush1.msra.mxu0 %v2971
    %v2973 = vand.u32 %v53, 4294901760
    %2974 = vmatprep.subr.mxu0 %v2973
    %v2975 = vand.u32 %v52, 4294901760
    %2976 = vmatpush1.msra.mxu0 %v2975
    %v2977 = vand.u32 %v55, 4294901760
    %2978 = vmatprep.subr.mxu0 %v2977
    %v2979 = vand.u32 %v54, 4294901760
    %2980 = vmatpush1.msra.mxu0 %v2979
    %v2981 = vand.u32 %v57, 4294901760
    %2982 = vmatprep.subr.mxu0 %v2981
    %v2983 = vand.u32 %v56, 4294901760
    %2984 = vmatpush1.msra.mxu0 %v2983
    %v2985 = vand.u32 %v59, 4294901760
    %2986 = vmatprep.subr.mxu0 %v2985
    %v2987 = vand.u32 %v58, 4294901760
    %2988 = vmatpush1.msra.mxu0 %v2987
    %v2989 = vand.u32 %v61, 4294901760
    %2990 = vmatprep.subr.mxu0 %v2989
    %v2991 = vand.u32 %v60, 4294901760
    %2992 = vmatpush1.msra.mxu0 %v2991
    %v2993 = vand.u32 %v63, 4294901760
    %2994 = vmatprep.subr.mxu0 %v2993
    %v2995 = vand.u32 %v62, 4294901760
    %2996 = vmatpush1.msra.mxu0 %v2995
    %v2997 = vand.u32 %v65, 4294901760
    %2998 = vmatprep.subr.mxu0 %v2997
    %v2999 = vand.u32 %v64, 4294901760
    %3000 = vmatpush1.msra.mxu0 %v2999
    %v3001 = vand.u32 %v67, 4294901760
    %3002 = vmatprep.subr.mxu0 %v3001
    %v3003 = vand.u32 %v66, 4294901760
    %3004 = vmatpush1.msra.mxu0 %v3003
    %v3005 = vand.u32 %v69, 4294901760
    %3006 = vmatprep.subr.mxu0 %v3005
    %v3007 = vand.u32 %v68, 4294901760
    %3008 = vmatpush1.msra.mxu0 %v3007
    %v3009 = vand.u32 %v71, 4294901760
    %3010 = vmatprep.subr.mxu0 %v3009
    %v3011 = vand.u32 %v70, 4294901760
    %3012 = vmatpush1.msra.mxu0 %v3011
    %v3013 = vand.u32 %v73, 4294901760
    %3014 = vmatprep.subr.mxu0 %v3013
    %v3015 = vand.u32 %v72, 4294901760
    %3016 = vmatpush1.msra.mxu0 %v3015
    %v3017 = vand.u32 %v75, 4294901760
    %3018 = vmatprep.subr.mxu0 %v3017
    %v3019 = vand.u32 %v74, 4294901760
    %3020 = vmatpush1.msra.mxu0 %v3019
    %v3021 = vand.u32 %v77, 4294901760
    %3022 = vmatprep.subr.mxu0 %v3021
    %v3023 = vand.u32 %v76, 4294901760
    %3024 = vmatpush1.msra.mxu0 %v3023
    %v3025 = vand.u32 %v79, 4294901760
    %3026 = vmatprep.subr.mxu0 %v3025
    %v3027 = vand.u32 %v78, 4294901760
    %3028 = vmatpush1.msra.mxu0 %v3027
    %v3029 = vand.u32 %v81, 4294901760
    %3030 = vmatprep.subr.mxu0 %v3029
    %v3031 = vand.u32 %v80, 4294901760
    %3032 = vmatpush1.msra.mxu0 %v3031
    %v3033 = vand.u32 %v83, 4294901760
    %3034 = vmatprep.subr.mxu0 %v3033
    %v3035 = vand.u32 %v82, 4294901760
    %3036 = vmatpush1.msra.mxu0 %v3035
    %v3037 = vand.u32 %v85, 4294901760
    %3038 = vmatprep.subr.mxu0 %v3037
    %v3039 = vand.u32 %v84, 4294901760
    %3040 = vmatpush1.msra.mxu0 %v3039
    %v3041 = vand.u32 %v87, 4294901760
    %3042 = vmatprep.subr.mxu0 %v3041
    %v3043 = vand.u32 %v86, 4294901760
    %3044 = vmatpush1.msra.mxu0 %v3043
    %v3045 = vand.u32 %v89, 4294901760
    %3046 = vmatprep.subr.mxu0 %v3045
    %v3047 = vand.u32 %v88, 4294901760
    %3048 = vmatpush1.msra.mxu0 %v3047
    %v3049 = vand.u32 %v91, 4294901760
    %3050 = vmatprep.subr.mxu0 %v3049
    %v3051 = vand.u32 %v90, 4294901760
    %3052 = vmatpush1.msra.mxu0 %v3051
    %v3053 = vand.u32 %v93, 4294901760
    %3054 = vmatprep.subr.mxu0 %v3053
    %v3055 = vand.u32 %v92, 4294901760
    %3056 = vmatpush1.msra.mxu0 %v3055
    %v3057 = vand.u32 %v95, 4294901760
    %3058 = vmatprep.subr.mxu0 %v3057
    %v3059 = vand.u32 %v94, 4294901760
    %3060 = vmatpush1.msra.mxu0 %v3059
    %v3061 = vand.u32 %v97, 4294901760
    %3062 = vmatprep.subr.mxu0 %v3061
    %v3063 = vand.u32 %v96, 4294901760
    %3064 = vmatpush1.msra.mxu0 %v3063
    %v3065 = vand.u32 %v99, 4294901760
    %3066 = vmatprep.subr.mxu0 %v3065
    %v3067 = vand.u32 %v98, 4294901760
    %3068 = vmatpush1.msra.mxu0 %v3067
    %v3069 = vand.u32 %v101, 4294901760
    %3070 = vmatprep.subr.mxu0 %v3069
    %v3071 = vand.u32 %v100, 4294901760
    %3072 = vmatpush1.msra.mxu0 %v3071
    %v3073 = vand.u32 %v103, 4294901760
    %3074 = vmatprep.subr.mxu0 %v3073
    %v3075 = vand.u32 %v102, 4294901760
    %3076 = vmatpush1.msra.mxu0 %v3075
    %v3077 = vand.u32 %v309, 4294901760
    %3078 = vmatprep.mubr.f32.mxu0 %v3077
    %v3079 = vand.u32 %v206, 4294901760
    %3080 = vmatmul.mubr.f32.gmra.mrb[0].mxu0 %v3079
    %v3081 = vpop.f32.mrb[0].mxu0
    %v3082 = vadd.f32 %v2945, %v3081
    %v3083 = vpop.f32.mrb[0].mxu0
    %v3084 = vadd.f32 %v2947, %v3083
    %3085 = vdwg.mxu0
    %v3086 = vmul.f32 %v206, %v1798
    %v3087 = vmul.f32 %v309, %v1800
    %v3088 = vmul.f32 %v413, %v3082
    %v3089 = vmul.f32 %v517, %v3084
    %v3090 = vsub.f32 %v3086, %v3088
    %v3091 = vsub.f32 %v3087, %v3089
    %v3092 = vmul.f32 %v3090, 0.2
    %v3093 = vmul.f32 %v3091, 0.2
    %v3094 = vadd.f32 %v3092, 0.5
    %v3095 = vadd.f32 %v3093, 0.5
    %3096 = vst [vmem:[#allocation7] sm:$0xff] %v3094
    %3097 = vst [vmem:[#allocation7 + $0x8] sm:$0xff] %v3095
    // Predicated region
    $region18: #{tpu_custom_call.1} parent=1 // pred_check
      _
    $region19: #{tpu_custom_call.1} parent=1 // pred_check_branch
      %3099 = sbr.rel (0) target = $region21
    $region20: #{tpu_custom_call.1} parent=1 // pred_region
      %s3101 = ssub.s32 256, 256
      %3102 = vsyncadd [#allocation4], %s3101
      %s3104 = sshll.u32 [#allocation7], 4
      %s3105 = int_to_ptr.vmem [resolvable:$true] %s3104
      %3107 = dma.vmem_to_hbm [thread:$0]  %s3105, 256, %s2, [#allocation4]
    $region21: #{tpu_custom_call.1} parent=1 // pred_fallthru
      _
    // Predicated region
    $region22: #{tpu_custom_call.1} parent=1 // pred_check
      _
    $region23: #{tpu_custom_call.1} parent=1 // pred_check_branch
      %3109 = sbr.rel (0) target = $region25
    $region24: #{tpu_custom_call.1} parent=1 // pred_region
      %3110 = dma.done [#allocation4], 256
    $region25: #{tpu_custom_call.1} parent=1 // pred_fallthru
      _
    %3111 = vsyncpa [#allocation3], 1
    %3112 = vsyncpa [#allocation6], 1
    %3113 = vsyncpa [#allocation4], 1

</llo_original>
